<compile_context>
chip_gen: v5e
topology: v5e:2x2
jax: 0.10.0
libtpu: 0.0.40
codegen_flags: <defaults>
</compile_context>

<pallas_src>
import numpy as np
import jax
import jax.numpy as jnp
from jax.experimental import pallas as pl
from jax.experimental.pallas import tpu as pltpu


def _round_up(x, m):
    return ((x + m - 1) // m) * m


def _pair(v):
    return (v, v) if isinstance(v, int) else tuple(v)


# ------------------------- Pallas kernels -------------------------

def _gemm_kernel(a_ref, b_ref, o_ref, acc_ref):
    @pl.when(pl.program_id(3) == 0)
    def _init():
        acc_ref[...] = jnp.zeros_like(acc_ref)

    acc_ref[...] += jnp.dot(a_ref[...], b_ref[...],
                            preferred_element_type=jnp.float32)

    @pl.when(pl.program_id(3) == pl.num_programs(3) - 1)
    def _store():
        o_ref[...] = acc_ref[...]


def _gemm_bnprelu_kernel(a_ref, b_ref, s_ref, t_ref, al_ref, o_ref, acc_ref):
    @pl.when(pl.program_id(3) == 0)
    def _init():
        acc_ref[...] = jnp.zeros_like(acc_ref)

    acc_ref[...] += jnp.dot(a_ref[...], b_ref[...],
                            preferred_element_type=jnp.float32)

    @pl.when(pl.program_id(3) == pl.num_programs(3) - 1)
    def _store():
        z = acc_ref[...] * s_ref[...] + t_ref[...]          # fused BN
        o_ref[...] = jnp.where(z >= 0.0, z, al_ref[...] * z)  # fused PReLU


# ------------------------- tiled grouped GEMM wrapper -------------------------

def grouped_matmul(A, B, bn=None):
    """A: [G, M, K], B: [G, K, Nc] -> f32 [G, M, Nc].

    Tiled MXU GEMM (bf16 operands, f32 VMEM accumulator). `bn`, if given, is
    (scale, shift, alpha) each of shape [G, Nc], fused into the epilogue as
    BatchNorm (inference) + PReLU.
    """
    G, M, K = A.shape
    _, _, Nc = B.shape

    TM = min(512, _round_up(M, 8))
    TK = min(512, _round_up(K, 128))
    TN = min(256, _round_up(Nc, 128))
    Mp, Kp, Np = _round_up(M, TM), _round_up(K, TK), _round_up(Nc, TN)

    Ap = jnp.pad(A, ((0, 0), (0, Mp - M), (0, Kp - K))).astype(jnp.bfloat16)
    Bp = jnp.pad(B, ((0, 0), (0, Kp - K), (0, Np - Nc))).astype(jnp.bfloat16)

    grid = (G, Mp // TM, Np // TN, Kp // TK)
    a_spec = pl.BlockSpec((None, TM, TK), lambda g, i, j, k: (g, i, k))
    b_spec = pl.BlockSpec((None, TK, TN), lambda g, i, j, k: (g, k, j))
    o_spec = pl.BlockSpec((None, TM, TN), lambda g, i, j, k: (g, i, j))
    params = pltpu.CompilerParams(
        dimension_semantics=("parallel", "parallel", "parallel", "arbitrary"),
        vmem_limit_bytes=32 * 1024 * 1024)
    scratch = [pltpu.VMEM((TM, TN), jnp.float32)]

    if bn is None:
        out = pl.pallas_call(
            _gemm_kernel,
            out_shape=jax.ShapeDtypeStruct((G, Mp, Np), jnp.float32),
            grid=grid,
            in_specs=[a_spec, b_spec],
            out_specs=o_spec,
            scratch_shapes=scratch,
            compiler_params=params,
        )(Ap, Bp)
    else:
        s, t, al = bn                                   # each [G, Nc]
        pads = ((0, 0), (0, Np - Nc))
        s = jnp.pad(s, pads).reshape(G, 1, Np).astype(jnp.float32)
        t = jnp.pad(t, pads).reshape(G, 1, Np).astype(jnp.float32)
        al = jnp.pad(al, pads).reshape(G, 1, Np).astype(jnp.float32)
        p_spec = pl.BlockSpec((None, 1, TN), lambda g, i, j, k: (g, 0, j))
        out = pl.pallas_call(
            _gemm_bnprelu_kernel,
            out_shape=jax.ShapeDtypeStruct((G, Mp, Np), jnp.float32),
            grid=grid,
            in_specs=[a_spec, b_spec, p_spec, p_spec, p_spec],
            out_specs=o_spec,
            scratch_shapes=scratch,
            compiler_params=params,
        )(Ap, Bp, s, t, al)
    return out[:, :M, :Nc]


# ------------------------- DeConv = ConvTranspose2d (+BN+PReLU) -------------------------

def deconv2d(x, w, stride, padding, output_padding, dilation, groups, bn=None):
    """PyTorch ConvTranspose2d semantics (bias=False), NCHW in / NCHW out.

    x: [N, Cin, H, W]; w: [Cin, Cout//groups, kh, kw].
    """
    N, Cin, H, W = x.shape
    _, Cog, kh, kw = w.shape
    Cout = Cog * groups
    assert Cin % groups == 0
    Cin_g = Cin // groups
    sh, sw = stride
    ph, pw = padding
    oph, opw = output_padding
    dh, dw = dilation

    Ho = (H - 1) * sh - 2 * ph + dh * (kh - 1) + oph + 1
    Wo = (W - 1) * sw - 2 * pw + dw * (kw - 1) + opw + 1

    # 1) zero-insert (stride dilation) of the input.
    if sh == 1 and sw == 1:
        xd = x
    else:
        xd = jnp.zeros((N, Cin, (H - 1) * sh + 1, (W - 1) * sw + 1), x.dtype)
        xd = xd.at[:, :, ::sh, ::sw].set(x)

    # 2) pad/crop so a stride-1 dilated conv with the flipped weight is exact.
    pt, pb = dh * (kh - 1) - ph, dh * (kh - 1) - ph + oph
    plft, prgt = dw * (kw - 1) - pw, dw * (kw - 1) - pw + opw
    xp = jnp.pad(xd, ((0, 0), (0, 0),
                      (max(pt, 0), max(pb, 0)),
                      (max(plft, 0), max(prgt, 0))))
    hs, he = -min(pt, 0), xp.shape[2] + min(pb, 0)
    ws, we = -min(plft, 0), xp.shape[3] + min(prgt, 0)
    xp = xp[:, :, hs:he, ws:we]

    # 3) im2col (stride 1, dilation d) -> A[G, M, Kg], grouped without
    #    block-diagonal expansion.
    cols = [xp[:, :, ki * dh: ki * dh + Ho, kj * dw: kj * dw + Wo]
            for ki in range(kh) for kj in range(kw)]
    patches = jnp.stack(cols, axis=2)                      # [N, Cin, kh*kw, Ho, Wo]
    patches = patches.reshape(N, groups, Cin_g, kh * kw, Ho, Wo)
    A = patches.transpose(1, 0, 4, 5, 2, 3).reshape(
        groups, N * Ho * Wo, Cin_g * kh * kw)

    # 4) spatially flipped, channel-transposed weight -> B[G, Kg, Cog]
    #    with the SAME K ordering as A.
    wg = w.reshape(groups, Cin_g, Cog, kh, kw)
    wf = jnp.flip(wg, axis=(3, 4))                         # [G, Cin_g, Cog, kh, kw]
    B = wf.transpose(0, 1, 3, 4, 2).reshape(groups, Cin_g * kh * kw, Cog)

    # 5) grouped per-output-channel BN/PReLU params (fused epilogue).
    gbn = None
    if bn is not None:
        s, t, al = bn
        gbn = (s.reshape(groups, Cog), t.reshape(groups, Cog),
               al.reshape(groups, Cog))

    out = grouped_matmul(A, B, bn=gbn)                     # [G, M, Cog], f32
    out = out.reshape(groups, N, Ho, Wo, Cog)
    out = out.transpose(1, 0, 4, 2, 3).reshape(N, Cout, Ho, Wo)
    return out


# ------------------------- parameter construction -------------------------

def init_bnprelu(C, eps=1e-3):
    gamma = jnp.ones((C,), jnp.float32)
    beta = jnp.zeros((C,), jnp.float32)
    mean = jnp.zeros((C,), jnp.float32)
    var = jnp.ones((C,), jnp.float32)
    scale = gamma / jnp.sqrt(var + eps)
    shift = beta - mean * scale
    alpha = jnp.full((C,), 0.25, jnp.float32)              # PReLU default init
    return dict(scale=scale, shift=shift, alpha=alpha)


def make_deconv(nIn, nOut, kSize, stride, padding, output_padding,
                dilation=(1, 1), groups=1, bn_acti=False, key=None):
    # TODO(synk): bias=True is not supported (module default is bias=False).
    kh, kw = _pair(kSize)
    if key is None:
        key = jax.random.PRNGKey(0)
    w = jax.random.normal(key, (nIn, nOut // groups, kh, kw), jnp.float32) * 0.1
    p = dict(w=w, stride=_pair(stride), padding=_pair(padding),
             output_padding=_pair(output_padding), dilation=_pair(dilation),
             groups=groups, bn_acti=bn_acti)
    if bn_acti:
        p['bn'] = init_bnprelu(nOut)
    return p


def run_deconv(p, x):
    bn = None
    if p['bn_acti']:
        b = p['bn']
        bn = (b['scale'], b['shift'], b['alpha'])
    return deconv2d(x, p['w'], p['stride'], p['padding'], p['output_padding'],
                    p['dilation'], p['groups'], bn=bn)


# ------------------------- numpy reference (direct scatter definition) -------------------------

def deconv_reference(x, w, stride, padding, output_padding, dilation, groups,
                     bn=None):
    x = np.asarray(x, np.float64)
    w = np.asarray(w, np.float64)
    N, Cin, H, W_ = x.shape
    _, Cog, kh, kw = w.shape
    Cout = Cog * groups
    Cin_g = Cin // groups
    sh, sw = stride
    ph, pw = padding
    oph, opw = output_padding
    dh, dw = dilation
    Ho = (H - 1) * sh - 2 * ph + dh * (kh - 1) + oph + 1
    Wo = (W_ - 1) * sw - 2 * pw + dw * (kw - 1) + opw + 1
    ch = (H - 1) * sh + (kh - 1) * dh + 1 + oph
    cw = (W_ - 1) * sw + (kw - 1) * dw + 1 + opw
    canvas = np.zeros((N, Cout, ch, cw), np.float64)
    for g in range(groups):
        xg = x[:, g * Cin_g:(g + 1) * Cin_g]
        wg = w[g * Cin_g:(g + 1) * Cin_g]
        for i in range(kh):
            for j in range(kw):
                contrib = np.einsum('nchw,co->nohw', xg, wg[:, :, i, j])
                canvas[:, g * Cog:(g + 1) * Cog,
                       i * dh: i * dh + (H - 1) * sh + 1: sh,
                       j * dw: j * dw + (W_ - 1) * sw + 1: sw] += contrib
    out = canvas[:, :, ph:ph + Ho, pw:pw + Wo]
    if bn is not None:
        s, t, a = (np.asarray(v, np.float64).reshape(1, -1, 1, 1) for v in bn)
        z = out * s + t
        out = np.where(z >= 0.0, z, a * z)
    return out


# ------------------------- demo / self-check -------------------------

if __name__ == "__main__":
    key = jax.random.PRNGKey(0)
    kx, kw1, kw2 = jax.random.split(key, 3)

    x = jax.random.normal(kx, (2, 32, 16, 16), jnp.float32)

    # Case 1: decoder-style DeConv(32 -> 16, k=3, s=2, p=1, op=1, bn_acti=True)
    dc1 = make_deconv(32, 16, 3, 2, 1, 1, dilation=1, groups=1,
                      bn_acti=True, key=kw1)
    fwd1 = jax.jit(lambda inp: run_deconv(dc1, inp))
    y1 = fwd1(x)
    jax.block_until_ready(y1)
    assert y1.shape == (2, 16, 32, 32), y1.shape
    assert y1.dtype == jnp.float32

    # Case 2: grouped DeConv(32 -> 32, groups=4, bn_acti=False)
    dc2 = make_deconv(32, 32, 3, 2, 1, 1, dilation=1, groups=4,
                      bn_acti=False, key=kw2)
    fwd2 = jax.jit(lambda inp: run_deconv(dc2, inp))
    y2 = fwd2(x)
    jax.block_until_ready(y2)
    assert y2.shape == (2, 32, 32, 32), y2.shape

    # Numerical check against the direct ConvTranspose2d (scatter) definition.
    ref1 = deconv_reference(x, dc1['w'], dc1['stride'], dc1['padding'],
                            dc1['output_padding'], dc1['dilation'],
                            dc1['groups'],
                            bn=(dc1['bn']['scale'], dc1['bn']['shift'],
                                dc1['bn']['alpha']))
    ref2 = deconv_reference(x, dc2['w'], dc2['stride'], dc2['padding'],
                            dc2['output_padding'], dc2['dilation'],
                            dc2['groups'])
    err1 = float(np.max(np.abs(np.asarray(y1) - ref1)))
    err2 = float(np.max(np.abs(np.asarray(y2) - ref2)))
    assert np.allclose(np.asarray(y1), ref1, atol=3e-2, rtol=3e-2), err1
    assert np.allclose(np.asarray(y2), ref2, atol=3e-2, rtol=3e-2), err2

    print("KERNEL_OK")
</pallas_src>

<mosaic_0001>
module attributes {stable_mosaic.version = 11 : i64} {
  func.func @_gemm_bnprelu_kernel(%arg0: i32, %arg1: i32, %arg2: i32, %arg3: i32, %arg4: memref<1x512x384xbf16, #tpu.memory_space<vmem>>, %arg5: memref<1x384x128xbf16, #tpu.memory_space<vmem>>, %arg6: memref<1x1x128xf32, #tpu.memory_space<vmem>>, %arg7: memref<1x1x128xf32, #tpu.memory_space<vmem>>, %arg8: memref<1x1x128xf32, #tpu.memory_space<vmem>>, %arg9: memref<1x512x128xf32, #tpu.memory_space<vmem>>, %arg10: memref<512x128xf32, #tpu.memory_space<vmem>>) attributes {dimension_semantics = [#tpu.dimension_semantics<parallel>, #tpu.dimension_semantics<parallel>, #tpu.dimension_semantics<parallel>, #tpu.dimension_semantics<arbitrary>], iteration_bounds = array<i64: 1, 4, 1, 1>, scalar_prefetch = 0 : i64, scratch_operands = 1 : i64, tpu.core_type = #tpu.core_type<tc>, window_params = [{transform_indices = @transform_0, window_bounds = array<i64: 1, 512, 384>}, {transform_indices = @transform_1, window_bounds = array<i64: 1, 384, 128>}, {transform_indices = @transform_2, window_bounds = array<i64: 1, 1, 128>}, {transform_indices = @transform_3, window_bounds = array<i64: 1, 1, 128>}, {transform_indices = @transform_4, window_bounds = array<i64: 1, 1, 128>}, {transform_indices = @transform_5, window_bounds = array<i64: 1, 512, 128>}]} {
    %c0_i32 = arith.constant 0 : i32
    %0 = arith.cmpi eq, %arg3, %c0_i32 : i32
    %1 = arith.extui %0 : i1 to i32
    %c0_i32_0 = arith.constant 0 : i32
    %2 = arith.cmpi ne, %1, %c0_i32_0 : i32
    scf.if %2 {
      %cst_12 = arith.constant 0.000000e+00 : f32
      %14 = vector.broadcast %cst_12 : f32 to vector<512x128xf32>
      %c0_13 = arith.constant 0 : index
      %c0_14 = arith.constant 0 : index
      %15 = vector.load %arg10[%c0_13, %c0_14] : memref<512x128xf32, #tpu.memory_space<vmem>>, vector<512x128xf32>
      tpu.vector_store %arg10[%c0_13, %c0_14], %14 {strides = array<i32>} : memref<512x128xf32, #tpu.memory_space<vmem>>, vector<512x128xf32>,
    } else {
    }
    %c0 = arith.constant 0 : index
    %c0_1 = arith.constant 0 : index
    %3 = vector.load %arg10[%c0, %c0_1] : memref<512x128xf32, #tpu.memory_space<vmem>>, vector<512x128xf32>
    %c0_2 = arith.constant 0 : index
    %c0_3 = arith.constant 0 : index
    %c0_4 = arith.constant 0 : index
    %4 = vector.load %arg4[%c0_2, %c0_3, %c0_4] : memref<1x512x384xbf16, #tpu.memory_space<vmem>>, vector<1x512x384xbf16>
    %5 = vector.shape_cast %4 : vector<1x512x384xbf16> to vector<512x384xbf16>
    %c0_5 = arith.constant 0 : index
    %c0_6 = arith.constant 0 : index
    %c0_7 = arith.constant 0 : index
    %6 = vector.load %arg5[%c0_5, %c0_6, %c0_7] : memref<1x384x128xbf16, #tpu.memory_space<vmem>>, vector<1x384x128xbf16>
    %7 = vector.shape_cast %6 : vector<1x384x128xbf16> to vector<384x128xbf16>
    %cst = arith.constant dense<0.000000e+00> : vector<512x128xf32>
    %8 = tpu.matmul %5, %7, %cst {dimension_numbers = #tpu.dot_dimension_numbers<[1], [0], [0], [1], [0, 0, 1, 1], [], []>} : vector<512x384xbf16>, vector<384x128xbf16>, vector<512x128xf32> -> vector<512x128xf32>
    %9 = arith.addf %3, %8 : vector<512x128xf32>
    %c0_8 = arith.constant 0 : index
    %c0_9 = arith.constant 0 : index
    %10 = vector.load %arg10[%c0_8, %c0_9] : memref<512x128xf32, #tpu.memory_space<vmem>>, vector<512x128xf32>
    tpu.vector_store %arg10[%c0_8, %c0_9], %9 {strides = array<i32>} : memref<512x128xf32, #tpu.memory_space<vmem>>, vector<512x128xf32>,
    %c0_i32_10 = arith.constant 0 : i32
    %11 = arith.cmpi eq, %arg3, %c0_i32_10 : i32
    %12 = arith.extui %11 : i1 to i32
    %c0_i32_11 = arith.constant 0 : i32
    %13 = arith.cmpi ne, %12, %c0_i32_11 : i32
    scf.if %13 {
      %c0_12 = arith.constant 0 : index
      %c0_13 = arith.constant 0 : index
      %14 = vector.load %arg10[%c0_12, %c0_13] : memref<512x128xf32, #tpu.memory_space<vmem>>, vector<512x128xf32>
      %c0_14 = arith.constant 0 : index
      %c0_15 = arith.constant 0 : index
      %c0_16 = arith.constant 0 : index
      %15 = vector.load %arg6[%c0_14, %c0_15, %c0_16] : memref<1x1x128xf32, #tpu.memory_space<vmem>>, vector<1x1x128xf32>
      %16 = vector.shape_cast %15 : vector<1x1x128xf32> to vector<1x128xf32>
      %17 = vector.broadcast %16 : vector<1x128xf32> to vector<512x128xf32>
      %18 = arith.mulf %14, %17 : vector<512x128xf32>
      %c0_17 = arith.constant 0 : index
      %c0_18 = arith.constant 0 : index
      %c0_19 = arith.constant 0 : index
      %19 = vector.load %arg7[%c0_17, %c0_18, %c0_19] : memref<1x1x128xf32, #tpu.memory_space<vmem>>, vector<1x1x128xf32>
      %20 = vector.shape_cast %19 : vector<1x1x128xf32> to vector<1x128xf32>
      %21 = vector.broadcast %20 : vector<1x128xf32> to vector<512x128xf32>
      %22 = arith.addf %18, %21 : vector<512x128xf32>
      %cst_20 = arith.constant 0.000000e+00 : f32
      %23 = vector.broadcast %cst_20 : f32 to vector<512x128xf32>
      %24 = arith.cmpf oge, %22, %23 : vector<512x128xf32>
      %c0_21 = arith.constant 0 : index
      %c0_22 = arith.constant 0 : index
      %c0_23 = arith.constant 0 : index
      %25 = vector.load %arg8[%c0_21, %c0_22, %c0_23] : memref<1x1x128xf32, #tpu.memory_space<vmem>>, vector<1x1x128xf32>
      %26 = vector.shape_cast %25 : vector<1x1x128xf32> to vector<1x128xf32>
      %27 = vector.broadcast %26 : vector<1x128xf32> to vector<512x128xf32>
      %28 = arith.mulf %27, %22 : vector<512x128xf32>
      %29 = arith.select %24, %22, %28 : vector<512x128xi1>, vector<512x128xf32>
      %c0_24 = arith.constant 0 : index
      %c0_25 = arith.constant 0 : index
      %c0_26 = arith.constant 0 : index
      %30 = vector.load %arg9[%c0_24, %c0_25, %c0_26] : memref<1x512x128xf32, #tpu.memory_space<vmem>>, vector<1x512x128xf32>
      %31 = vector.shape_cast %30 : vector<1x512x128xf32> to vector<512x128xf32>
      %32 = vector.shape_cast %29 : vector<512x128xf32> to vector<1x512x128xf32>
      tpu.vector_store %arg9[%c0_24, %c0_25, %c0_26], %32 {strides = array<i32>} : memref<1x512x128xf32, #tpu.memory_space<vmem>>, vector<1x512x128xf32>,
    } else {
    }
    return
  }
  func.func @transform_0(%arg0: i32, %arg1: i32, %arg2: i32, %arg3: i32) -> (i32, i32, i32) {
    %c0_i32 = arith.constant 0 : i32
    return %arg0, %arg1, %arg3 : i32, i32, i32
  }
  func.func @transform_1(%arg0: i32, %arg1: i32, %arg2: i32, %arg3: i32) -> (i32, i32, i32) {
    %c0_i32 = arith.constant 0 : i32
    return %arg0, %arg3, %arg2 : i32, i32, i32
  }
  func.func @transform_2(%arg0: i32, %arg1: i32, %arg2: i32, %arg3: i32) -> (i32, i32, i32) {
    %c0_i32 = arith.constant 0 : i32
    %c0_i32_0 = arith.constant 0 : i32
    return %arg0, %c0_i32, %arg2 : i32, i32, i32
  }
  func.func @transform_3(%arg0: i32, %arg1: i32, %arg2: i32, %arg3: i32) -> (i32, i32, i32) {
    %c0_i32 = arith.constant 0 : i32
    %c0_i32_0 = arith.constant 0 : i32
    return %arg0, %c0_i32, %arg2 : i32, i32, i32
  }
  func.func @transform_4(%arg0: i32, %arg1: i32, %arg2: i32, %arg3: i32) -> (i32, i32, i32) {
    %c0_i32 = arith.constant 0 : i32
    %c0_i32_0 = arith.constant 0 : i32
    return %arg0, %c0_i32, %arg2 : i32, i32, i32
  }
  func.func @transform_5(%arg0: i32, %arg1: i32, %arg2: i32, %arg3: i32) -> (i32, i32, i32) {
    %c0_i32 = arith.constant 0 : i32
    return %arg0, %arg1, %arg2 : i32, i32, i32
  }
}

</mosaic_0001>

<llo_original>
// kernel: _lambda_.1
$region0: #{_lambda_.1}
  #allocation0 [shape = 'u32[]', space=smem, size = 0x4, offset = 0x4, fixed_abs, tag = 'smem constant byte address 0x4 - core index']
  #allocation1 [shape = 'u32[72,128]{1,0:T(1,128)}', space=vmem, size = 0x9000, scoped, tag = 'internal scratch']
  #allocation2 [shape = 'f32[512,128]{1,0:T(8,128)}', space=vmem, size = 0x40000, scoped, tag = 'scratch operand']
  %s0 = inlined_call_operand.vmem [shape: bf16[1,2048,384], index: 0, kind: input, shape index: {}]
  %s1 = inlined_call_operand.vmem [shape: bf16[1,384,128], index: 1, kind: input, shape index: {}]
  %s2 = inlined_call_operand.vmem [shape: f32[1,1,128], index: 2, kind: input, shape index: {}]
  %s3 = inlined_call_operand.vmem [shape: f32[1,1,128], index: 3, kind: input, shape index: {}]
  %s4 = inlined_call_operand.vmem [shape: f32[1,1,128], index: 4, kind: input, shape index: {}]
  %s5 = inlined_call_operand.vmem [shape: f32[1,2048,128], index: 5, kind: output, shape index: {}]
  %s6 = sld [smem:[#allocation0]]
  $region61: #{_lambda_.1} parent=0
    _
  %s8 = ssub.s32 1, %s6
  %s9 = scalar_select 0, %s8, %s6
  loop: start=0, step=1, limit=6
  $region2: #{_lambda_.1} parent=0 // loop_pre_header
    _
  $region3: #{_lambda_.1} parent=0 // loop_header
    %s11 = sphi 0, %s15
    %p12 = scmp.ge.s32.totalorder %s11, 6
    %s18 = sphi 0, %s44
    %s19 = sphi 0, %s40
    %s20 = sphi 0, %s36
    %s21 = sphi 0, %s32
    %s22 = sphi 0, %s18
    %s23 = sphi 0, %s19
    %s24 = sphi 0, %s20
    %s25 = sphi 0, %s21
    %s26 = sphi 0, %s22
    %s27 = sphi 0, %s23
    %s28 = sphi 0, %s24
    %s29 = sphi 0, %s25
    %s51 = sphi 0, %s53
    %s54 = sphi 0, %s51
    %s55 = sphi 0, %s54
    %s71 = sphi 0, %s55
    %s81 = sphi 0, %s83
    %s84 = sphi 0, %s81
    %s85 = sphi 0, %s84
    %s101 = sphi 0, %s85
    %s109 = sphi 0, %s111
    %s112 = sphi 0, %s109
    %s113 = sphi 0, %s112
    %s129 = sphi 0, %s113
    %s137 = sphi 0, %s139
    %s140 = sphi 0, %s137
    %s141 = sphi 0, %s140
    %s157 = sphi 0, %s141
    %s165 = sphi 0, %s167
    %s168 = sphi 0, %s165
    %s169 = sphi 0, %s168
    %s185 = sphi 0, %s169
    %s195 = sphi 0, %s197
    %s198 = sphi 0, %s195
    %s199 = sphi 0, %s198
    %s215 = sphi 0, %s199
  $region4: #{_lambda_.1} parent=0 // loop_header_branch
    %14 = sbr.rel (%p12) target = $region8
  $region5: #{_lambda_.1} parent=0 // loop_body
    %s16 = ssub.s32 %s11, 1
    %s17 = ssub.s32 %s11, 2
    %s30 = sadd.s32 1, %s21
    %p31 = scmp.ge.s32.totalorder %s30, 1
    %s32 = scalar_select %p31, 0, %s30
    %s33 = sadd.s32 1, %s20
    %s34 = scalar_select %p31, %s33, %s20
    %p35 = scmp.ge.s32.totalorder %s34, 1
    %s36 = scalar_select %p35, 0, %s34
    %s37 = sadd.s32 1, %s19
    %s38 = scalar_select %p35, %s37, %s19
    %p39 = scmp.ge.s32.totalorder %s38, 4
    %s40 = scalar_select %p39, 0, %s38
    %s41 = sadd.s32 1, %s18
    %s42 = scalar_select %p39, %s41, %s18
    %p43 = scmp.ge.s32.totalorder %s42, 1
    %s44 = scalar_select %p43, 0, %s42
    %s45 = ssub.s32 %s18, %s44
    %s46 = ssub.s32 %s19, %s40
    %s47 = sor.u32 %s45, %s46
    %s48 = ssub.s32 %s21, %s32
    %s49 = sor.u32 %s47, %s48
    %p50 = scmp.eq.s32.totalorder %s49, 0
    %s52 = sadd.s32 %s51, 1
    %s53 = scalar_select %p50, %s51, %s52
    %p56 = pneg %p50
    %p57 = scmp.eq.s32.totalorder %s11, 3
    %p58 = por %p56, %p57
    %p59 = scmp.ne.s32.totalorder %s51, %s54
    %p60 = scmp.eq.s32.totalorder %s11, 0
    %p61 = por %p59, %p60
    %p62 = scmp.ne.s32.totalorder %s51, %s54
    %p63 = scmp.eq.s32.totalorder %s16, 3
    %p64 = por %p62, %p63
    %p65 = scmp.ne.s32.totalorder %s54, %s55
    %p66 = scmp.eq.s32.totalorder %s16, 0
    %p67 = por %p65, %p66
    %p68 = scmp.ne.s32.totalorder %s54, %s55
    %p69 = scmp.eq.s32.totalorder %s17, 3
    %p70 = por %p68, %p69
    %p72 = scmp.ne.s32.totalorder %s55, %s71
    %p73 = scmp.eq.s32.totalorder %s17, 0
    %p74 = por %p72, %p73
    %s75 = ssub.s32 %s18, %s44
    %s76 = ssub.s32 %s21, %s32
    %s77 = sor.u32 %s75, %s76
    %s78 = ssub.s32 %s20, %s36
    %s79 = sor.u32 %s77, %s78
    %p80 = scmp.eq.s32.totalorder %s79, 0
    %s82 = sadd.s32 %s81, 1
    %s83 = scalar_select %p80, %s81, %s82
    %p86 = pneg %p80
    %p87 = scmp.eq.s32.totalorder %s11, 3
    %p88 = por %p86, %p87
    %p89 = scmp.ne.s32.totalorder %s81, %s84
    %p90 = scmp.eq.s32.totalorder %s11, 0
    %p91 = por %p89, %p90
    %p92 = scmp.ne.s32.totalorder %s81, %s84
    %p93 = scmp.eq.s32.totalorder %s16, 3
    %p94 = por %p92, %p93
    %p95 = scmp.ne.s32.totalorder %s84, %s85
    %p96 = scmp.eq.s32.totalorder %s16, 0
    %p97 = por %p95, %p96
    %p98 = scmp.ne.s32.totalorder %s84, %s85
    %p99 = scmp.eq.s32.totalorder %s17, 3
    %p100 = por %p98, %p99
    %p102 = scmp.ne.s32.totalorder %s85, %s101
    %p103 = scmp.eq.s32.totalorder %s17, 0
    %p104 = por %p102, %p103
    %s105 = ssub.s32 %s18, %s44
    %s106 = ssub.s32 %s20, %s36
    %s107 = sor.u32 %s105, %s106
    %p108 = scmp.eq.s32.totalorder %s107, 0
    %s110 = sadd.s32 %s109, 1
    %s111 = scalar_select %p108, %s109, %s110
    %p114 = pneg %p108
    %p115 = scmp.eq.s32.totalorder %s11, 3
    %p116 = por %p114, %p115
    %p117 = scmp.ne.s32.totalorder %s109, %s112
    %p118 = scmp.eq.s32.totalorder %s11, 0
    %p119 = por %p117, %p118
    %p120 = scmp.ne.s32.totalorder %s109, %s112
    %p121 = scmp.eq.s32.totalorder %s16, 3
    %p122 = por %p120, %p121
    %p123 = scmp.ne.s32.totalorder %s112, %s113
    %p124 = scmp.eq.s32.totalorder %s16, 0
    %p125 = por %p123, %p124
    %p126 = scmp.ne.s32.totalorder %s112, %s113
    %p127 = scmp.eq.s32.totalorder %s17, 3
    %p128 = por %p126, %p127
    %p130 = scmp.ne.s32.totalorder %s113, %s129
    %p131 = scmp.eq.s32.totalorder %s17, 0
    %p132 = por %p130, %p131
    %s133 = ssub.s32 %s18, %s44
    %s134 = ssub.s32 %s20, %s36
    %s135 = sor.u32 %s133, %s134
    %p136 = scmp.eq.s32.totalorder %s135, 0
    %s138 = sadd.s32 %s137, 1
    %s139 = scalar_select %p136, %s137, %s138
    %p142 = pneg %p136
    %p143 = scmp.eq.s32.totalorder %s11, 3
    %p144 = por %p142, %p143
    %p145 = scmp.ne.s32.totalorder %s137, %s140
    %p146 = scmp.eq.s32.totalorder %s11, 0
    %p147 = por %p145, %p146
    %p148 = scmp.ne.s32.totalorder %s137, %s140
    %p149 = scmp.eq.s32.totalorder %s16, 3
    %p150 = por %p148, %p149
    %p151 = scmp.ne.s32.totalorder %s140, %s141
    %p152 = scmp.eq.s32.totalorder %s16, 0
    %p153 = por %p151, %p152
    %p154 = scmp.ne.s32.totalorder %s140, %s141
    %p155 = scmp.eq.s32.totalorder %s17, 3
    %p156 = por %p154, %p155
    %p158 = scmp.ne.s32.totalorder %s141, %s157
    %p159 = scmp.eq.s32.totalorder %s17, 0
    %p160 = por %p158, %p159
    %s161 = ssub.s32 %s18, %s44
    %s162 = ssub.s32 %s20, %s36
    %s163 = sor.u32 %s161, %s162
    %p164 = scmp.eq.s32.totalorder %s163, 0
    %s166 = sadd.s32 %s165, 1
    %s167 = scalar_select %p164, %s165, %s166
    %p170 = pneg %p164
    %p171 = scmp.eq.s32.totalorder %s11, 3
    %p172 = por %p170, %p171
    %p173 = scmp.ne.s32.totalorder %s165, %s168
    %p174 = scmp.eq.s32.totalorder %s11, 0
    %p175 = por %p173, %p174
    %p176 = scmp.ne.s32.totalorder %s165, %s168
    %p177 = scmp.eq.s32.totalorder %s16, 3
    %p178 = por %p176, %p177
    %p179 = scmp.ne.s32.totalorder %s168, %s169
    %p180 = scmp.eq.s32.totalorder %s16, 0
    %p181 = por %p179, %p180
    %p182 = scmp.ne.s32.totalorder %s168, %s169
    %p183 = scmp.eq.s32.totalorder %s17, 3
    %p184 = por %p182, %p183
    %p186 = scmp.ne.s32.totalorder %s169, %s185
    %p187 = scmp.eq.s32.totalorder %s17, 0
    %p188 = por %p186, %p187
    %s189 = ssub.s32 %s18, %s44
    %s190 = ssub.s32 %s19, %s40
    %s191 = sor.u32 %s189, %s190
    %s192 = ssub.s32 %s20, %s36
    %s193 = sor.u32 %s191, %s192
    %p194 = scmp.eq.s32.totalorder %s193, 0
    %s196 = sadd.s32 %s195, 1
    %s197 = scalar_select %p194, %s195, %s196
    %p200 = pneg %p194
    %p201 = scmp.eq.s32.totalorder %s11, 3
    %p202 = por %p200, %p201
    %p203 = scmp.ne.s32.totalorder %s195, %s198
    %p204 = scmp.eq.s32.totalorder %s11, 0
    %p205 = por %p203, %p204
    %p206 = scmp.ne.s32.totalorder %s195, %s198
    %p207 = scmp.eq.s32.totalorder %s16, 3
    %p208 = por %p206, %p207
    %p209 = scmp.ne.s32.totalorder %s198, %s199
    %p210 = scmp.eq.s32.totalorder %s16, 0
    %p211 = por %p209, %p210
    %p212 = scmp.ne.s32.totalorder %s198, %s199
    %p213 = scmp.eq.s32.totalorder %s17, 3
    %p214 = por %p212, %p213
    %p216 = scmp.ne.s32.totalorder %s199, %s215
    %p217 = scmp.eq.s32.totalorder %s17, 0
    %p218 = por %p216, %p217
    %p219 = scmp.le.s32.totalorder 1, %s11
    %p220 = scmp.lt.s32.totalorder %s11, 5
    %p221 = pnand %p219, %p220
    %p222 = pneg %p221
    // Predicated region
    $region9: #{_lambda_.1} parent=5 // pred_check
      _
    $region10: #{_lambda_.1} parent=5 // pred_check_branch
      %224 = sbr.rel (%p221) target = $region12
    $region11: #{_lambda_.1} parent=5 // pred_region
      %s225 = ssub.s32 %s11, 1
      // Predicated region
      $region13: #{_lambda_.1} parent=11 // pred_check
        %p226 = pneg %p97
      $region14: #{_lambda_.1} parent=11 // pred_check_branch
        %228 = sbr.rel (%p226) target = $region16
      $region15: #{_lambda_.1} parent=11 // pred_region
        %s229 = smul.u32 48, %s25
        %p230 = scmp.lt.s32.totalorder %s22, 0
        %s231 = scalar_select %p230, %s22, 0
        %p232 = scmp.lt.s32.totalorder %s229, 47
        %s233 = scalar_select %p232, %s229, 47
        %p234 = scmp.lt.s32.totalorder %s24, 0
        %s235 = scalar_select %p234, %s24, 0
        %s236 = sadd.s32 %s235, %s233
        %s237 = smul.addr %s231, 48
        %s238 = sadd.s32 %s236, %s237
        %s239 = smul.addr %s238, 4
        %s240 = scalar_lea.vmem %s1, %s239
        %s241 = smul.u32 48, %s25
      $region16: #{_lambda_.1} parent=11 // pred_fallthru
        _
      // Predicated region
      $region17: #{_lambda_.1} parent=11 // pred_check
        %p242 = pneg %p125
      $region18: #{_lambda_.1} parent=11 // pred_check_branch
        %244 = sbr.rel (%p242) target = $region20
      $region19: #{_lambda_.1} parent=11 // pred_region
        %p245 = scmp.lt.s32.totalorder %s22, 0
        %s246 = scalar_select %p245, %s22, 0
        %p247 = scmp.lt.s32.totalorder %s24, 0
        %s248 = scalar_select %p247, %s24, 0
        %s249 = sadd.s32 %s248, %s246
        %s250 = scalar_lea.vmem %s2, %s249
      $region20: #{_lambda_.1} parent=11 // pred_fallthru
        _
      // Predicated region
      $region21: #{_lambda_.1} parent=11 // pred_check
        %p251 = pneg %p153
      $region22: #{_lambda_.1} parent=11 // pred_check_branch
        %253 = sbr.rel (%p251) target = $region24
      $region23: #{_lambda_.1} parent=11 // pred_region
        %p254 = scmp.lt.s32.totalorder %s22, 0
        %s255 = scalar_select %p254, %s22, 0
        %p256 = scmp.lt.s32.totalorder %s24, 0
        %s257 = scalar_select %p256, %s24, 0
        %s258 = sadd.s32 %s257, %s255
        %s259 = scalar_lea.vmem %s3, %s258
      $region24: #{_lambda_.1} parent=11 // pred_fallthru
        _
      // Predicated region
      $region25: #{_lambda_.1} parent=11 // pred_check
        %p260 = pneg %p181
      $region26: #{_lambda_.1} parent=11 // pred_check_branch
        %262 = sbr.rel (%p260) target = $region28
      $region27: #{_lambda_.1} parent=11 // pred_region
        %p263 = scmp.lt.s32.totalorder %s22, 0
        %s264 = scalar_select %p263, %s22, 0
        %p265 = scmp.lt.s32.totalorder %s24, 0
        %s266 = scalar_select %p265, %s24, 0
        %s267 = sadd.s32 %s266, %s264
        %s268 = scalar_lea.vmem %s4, %s267
      $region28: #{_lambda_.1} parent=11 // pred_fallthru
        _
    $region12: #{_lambda_.1} parent=5 // pred_fallthru
      _
    %p269 = scmp.lt.s32.totalorder %s11, 4
    // Predicated region
    $region29: #{_lambda_.1} parent=5 // pred_check
      %p270 = pneg %p269
    $region30: #{_lambda_.1} parent=5 // pred_check_branch
      %272 = sbr.rel (%p270) target = $region32
    $region31: #{_lambda_.1} parent=5 // pred_region
      // Predicated region
      $region33: #{_lambda_.1} parent=31 // pred_check
        %p273 = pneg %p61
      $region34: #{_lambda_.1} parent=31 // pred_check_branch
        %275 = sbr.rel (%p273) target = $region36
      $region35: #{_lambda_.1} parent=31 // pred_region
        %s276 = smul.u32 64, %s19
        %s277 = smul.u32 3, %s21
        %p278 = scmp.lt.s32.totalorder %s18, 0
        %s279 = scalar_select %p278, %s18, 0
        %p280 = scmp.lt.s32.totalorder %s276, 255
        %s281 = scalar_select %p280, %s276, 255
        %p282 = scmp.lt.s32.totalorder %s277, 2
        %s283 = scalar_select %p282, %s277, 2
        %s284 = smul.addr %s281, 3
        %s285 = sadd.s32 %s283, %s284
        %s286 = smul.addr %s279, 768
        %s287 = sadd.s32 %s285, %s286
        %s288 = smul.addr %s287, 4
        %s289 = scalar_lea.vmem %s0, %s288
        %s290 = smul.u32 64, %s19
        %s291 = smul.u32 3, %s21
      $region36: #{_lambda_.1} parent=31 // pred_fallthru
        _
    $region32: #{_lambda_.1} parent=5 // pred_fallthru
      _
    %p292 = scmp.le.s32.totalorder 1, %s11
    %p293 = scmp.lt.s32.totalorder %s11, 5
    %p294 = pnand %p292, %p293
    %p295 = pneg %p294
    // Predicated region
    $region37: #{_lambda_.1} parent=5 // pred_check
      _
    $region38: #{_lambda_.1} parent=5 // pred_check_branch
      %297 = sbr.rel (%p294) target = $region40
    $region39: #{_lambda_.1} parent=5 // pred_region
      %s298 = ssub.s32 %s11, 1
      %s299 = smul.u32 64, %s23
      %s300 = smul.u32 3, %s25
      %p301 = scmp.lt.s32.totalorder %s22, 0
      %s302 = scalar_select %p301, %s22, 0
      %p303 = scmp.lt.s32.totalorder %s299, 255
      %s304 = scalar_select %p303, %s299, 255
      %p305 = scmp.lt.s32.totalorder %s300, 2
      %s306 = scalar_select %p305, %s300, 2
      %s307 = smul.addr %s304, 3
      %s308 = sadd.s32 %s306, %s307
      %s309 = smul.addr %s302, 768
      %s310 = sadd.s32 %s308, %s309
      %s311 = smul.addr %s310, 4
      %s312 = scalar_lea.vmem %s0, %s311
      %p313 = pneg %p67
      %p314 = pneg %p64
      %s315 = smul.u32 48, %s25
      %p316 = scmp.lt.s32.totalorder %s22, 0
      %s317 = scalar_select %p316, %s22, 0
      %p318 = scmp.lt.s32.totalorder %s315, 47
      %s319 = scalar_select %p318, %s315, 47
      %p320 = scmp.lt.s32.totalorder %s24, 0
      %s321 = scalar_select %p320, %s24, 0
      %s322 = sadd.s32 %s321, %s319
      %s323 = smul.addr %s317, 48
      %s324 = sadd.s32 %s322, %s323
      %s325 = smul.addr %s324, 4
      %s326 = scalar_lea.vmem %s1, %s325
      %p327 = pneg %p97
      %p328 = pneg %p94
      %p329 = scmp.lt.s32.totalorder %s22, 0
      %s330 = scalar_select %p329, %s22, 0
      %p331 = scmp.lt.s32.totalorder %s24, 0
      %s332 = scalar_select %p331, %s24, 0
      %s333 = sadd.s32 %s332, %s330
      %s334 = scalar_lea.vmem %s2, %s333
      %p335 = pneg %p125
      %p336 = pneg %p122
      %p337 = scmp.lt.s32.totalorder %s22, 0
      %s338 = scalar_select %p337, %s22, 0
      %p339 = scmp.lt.s32.totalorder %s24, 0
      %s340 = scalar_select %p339, %s24, 0
      %s341 = sadd.s32 %s340, %s338
      %s342 = scalar_lea.vmem %s3, %s341
      %p343 = pneg %p153
      %p344 = pneg %p150
      %p345 = scmp.lt.s32.totalorder %s22, 0
      %s346 = scalar_select %p345, %s22, 0
      %p347 = scmp.lt.s32.totalorder %s24, 0
      %s348 = scalar_select %p347, %s24, 0
      %s349 = sadd.s32 %s348, %s346
      %s350 = scalar_lea.vmem %s4, %s349
      %p351 = pneg %p181
      %p352 = pneg %p178
      %p353 = pneg %p211
      %p354 = pneg %p208
      %s355 = smul.u32 64, %s23
      %p356 = scmp.lt.s32.totalorder %s22, 0
      %s357 = scalar_select %p356, %s22, 0
      %p358 = scmp.lt.s32.totalorder %s355, 255
      %s359 = scalar_select %p358, %s355, 255
      %p360 = scmp.lt.s32.totalorder %s24, 0
      %s361 = scalar_select %p360, %s24, 0
      %s362 = sadd.s32 %s361, %s359
      %s363 = smul.addr %s357, 256
      %s364 = sadd.s32 %s362, %s363
      %s365 = smul.addr %s364, 8
      %s366 = scalar_lea.vmem %s5, %s365
      %s367 = smul.u32 64, %s23
      %s368 = smul.u32 3, %s25
      %p369 = scmp.lt.s32.totalorder %s22, 0
      %s370 = scalar_select %p369, %s22, 0
      %p371 = scmp.lt.s32.totalorder %s367, 255
      %s372 = scalar_select %p371, %s367, 255
      %p373 = scmp.lt.s32.totalorder %s368, 2
      %s374 = scalar_select %p373, %s368, 2
      %s375 = smul.addr %s372, 3
      %s376 = sadd.s32 %s374, %s375
      %s377 = smul.addr %s370, 768
      %s378 = sadd.s32 %s376, %s377
      %s379 = smul.addr %s378, 4
      %s380 = scalar_lea.vmem %s0, %s379
      %s381 = smul.u32 64, %s23
      %s382 = smul.u32 3, %s25
      %s383 = smul.u32 48, %s25
      %p384 = scmp.lt.s32.totalorder %s22, 0
      %s385 = scalar_select %p384, %s22, 0
      %p386 = scmp.lt.s32.totalorder %s383, 47
      %s387 = scalar_select %p386, %s383, 47
      %p388 = scmp.lt.s32.totalorder %s24, 0
      %s389 = scalar_select %p388, %s24, 0
      %s390 = sadd.s32 %s389, %s387
      %s391 = smul.addr %s385, 48
      %s392 = sadd.s32 %s390, %s391
      %s393 = smul.addr %s392, 4
      %s394 = scalar_lea.vmem %s1, %s393
      %s395 = smul.u32 48, %s25
      %p396 = scmp.lt.s32.totalorder %s22, 0
      %s397 = scalar_select %p396, %s22, 0
      %p398 = scmp.lt.s32.totalorder %s24, 0
      %s399 = scalar_select %p398, %s24, 0
      %s400 = sadd.s32 %s399, %s397
      %s401 = scalar_lea.vmem %s2, %s400
      %p402 = scmp.lt.s32.totalorder %s22, 0
      %s403 = scalar_select %p402, %s22, 0
      %p404 = scmp.lt.s32.totalorder %s24, 0
      %s405 = scalar_select %p404, %s24, 0
      %s406 = sadd.s32 %s405, %s403
      %s407 = scalar_lea.vmem %s3, %s406
      %p408 = scmp.lt.s32.totalorder %s22, 0
      %s409 = scalar_select %p408, %s22, 0
      %p410 = scmp.lt.s32.totalorder %s24, 0
      %s411 = scalar_select %p410, %s24, 0
      %s412 = sadd.s32 %s411, %s409
      %s413 = scalar_lea.vmem %s4, %s412
      %s414 = smul.u32 64, %s23
      %p415 = scmp.lt.s32.totalorder %s22, 0
      %s416 = scalar_select %p415, %s22, 0
      %p417 = scmp.lt.s32.totalorder %s414, 255
      %s418 = scalar_select %p417, %s414, 255
      %p419 = scmp.lt.s32.totalorder %s24, 0
      %s420 = scalar_select %p419, %s24, 0
      %s421 = sadd.s32 %s420, %s418
      %s422 = smul.addr %s416, 256
      %s423 = sadd.s32 %s421, %s422
      %s424 = smul.addr %s423, 8
      %s425 = scalar_lea.vmem %s5, %s424
      %s426 = smul.u32 64, %s23
      %p427 = scmp.eq.s32.totalorder %s25, 0
      // Predicated region
      $region41: #{_lambda_.1} parent=39 // pred_check
        %p428 = pneg %p427
      $region42: #{_lambda_.1} parent=39 // pred_check_branch
        %430 = sbr.rel (%p428) target = $region44
      $region43: #{_lambda_.1} parent=39 // pred_region
        %431 = vst [vmem:[#allocation2] sm:$0xff] 0.0
        %432 = vst [vmem:[#allocation2 + $0x8] sm:$0xff] 0.0
        %433 = vst [vmem:[#allocation2 + $0x10] sm:$0xff] 0.0
        %434 = vst [vmem:[#allocation2 + $0x18] sm:$0xff] 0.0
        %435 = vst [vmem:[#allocation2 + $0x20] sm:$0xff] 0.0
        %436 = vst [vmem:[#allocation2 + $0x28] sm:$0xff] 0.0
        %437 = vst [vmem:[#allocation2 + $0x30] sm:$0xff] 0.0
        %438 = vst [vmem:[#allocation2 + $0x38] sm:$0xff] 0.0
        %439 = vst [vmem:[#allocation2 + $0x40] sm:$0xff] 0.0
        %440 = vst [vmem:[#allocation2 + $0x48] sm:$0xff] 0.0
        %441 = vst [vmem:[#allocation2 + $0x50] sm:$0xff] 0.0
        %442 = vst [vmem:[#allocation2 + $0x58] sm:$0xff] 0.0
        %443 = vst [vmem:[#allocation2 + $0x60] sm:$0xff] 0.0
        %444 = vst [vmem:[#allocation2 + $0x68] sm:$0xff] 0.0
        %445 = vst [vmem:[#allocation2 + $0x70] sm:$0xff] 0.0
        %446 = vst [vmem:[#allocation2 + $0x78] sm:$0xff] 0.0
        %447 = vst [vmem:[#allocation2 + $0x80] sm:$0xff] 0.0
        %448 = vst [vmem:[#allocation2 + $0x88] sm:$0xff] 0.0
        %449 = vst [vmem:[#allocation2 + $0x90] sm:$0xff] 0.0
        %450 = vst [vmem:[#allocation2 + $0x98] sm:$0xff] 0.0
        %451 = vst [vmem:[#allocation2 + $0xa0] sm:$0xff] 0.0
        %452 = vst [vmem:[#allocation2 + $0xa8] sm:$0xff] 0.0
        %453 = vst [vmem:[#allocation2 + $0xb0] sm:$0xff] 0.0
        %454 = vst [vmem:[#allocation2 + $0xb8] sm:$0xff] 0.0
        %455 = vst [vmem:[#allocation2 + $0xc0] sm:$0xff] 0.0
        %456 = vst [vmem:[#allocation2 + $0xc8] sm:$0xff] 0.0
        %457 = vst [vmem:[#allocation2 + $0xd0] sm:$0xff] 0.0
        %458 = vst [vmem:[#allocation2 + $0xd8] sm:$0xff] 0.0
        %459 = vst [vmem:[#allocation2 + $0xe0] sm:$0xff] 0.0
        %460 = vst [vmem:[#allocation2 + $0xe8] sm:$0xff] 0.0
        %461 = vst [vmem:[#allocation2 + $0xf0] sm:$0xff] 0.0
        %462 = vst [vmem:[#allocation2 + $0xf8] sm:$0xff] 0.0
        %463 = vst [vmem:[#allocation2 + $0x100] sm:$0xff] 0.0
        %464 = vst [vmem:[#allocation2 + $0x108] sm:$0xff] 0.0
        %465 = vst [vmem:[#allocation2 + $0x110] sm:$0xff] 0.0
        %466 = vst [vmem:[#allocation2 + $0x118] sm:$0xff] 0.0
        %467 = vst [vmem:[#allocation2 + $0x120] sm:$0xff] 0.0
        %468 = vst [vmem:[#allocation2 + $0x128] sm:$0xff] 0.0
        %469 = vst [vmem:[#allocation2 + $0x130] sm:$0xff] 0.0
        %470 = vst [vmem:[#allocation2 + $0x138] sm:$0xff] 0.0
        %471 = vst [vmem:[#allocation2 + $0x140] sm:$0xff] 0.0
        %472 = vst [vmem:[#allocation2 + $0x148] sm:$0xff] 0.0
        %473 = vst [vmem:[#allocation2 + $0x150] sm:$0xff] 0.0
        %474 = vst [vmem:[#allocation2 + $0x158] sm:$0xff] 0.0
        %475 = vst [vmem:[#allocation2 + $0x160] sm:$0xff] 0.0
        %476 = vst [vmem:[#allocation2 + $0x168] sm:$0xff] 0.0
        %477 = vst [vmem:[#allocation2 + $0x170] sm:$0xff] 0.0
        %478 = vst [vmem:[#allocation2 + $0x178] sm:$0xff] 0.0
        %479 = vst [vmem:[#allocation2 + $0x180] sm:$0xff] 0.0
        %480 = vst [vmem:[#allocation2 + $0x188] sm:$0xff] 0.0
        %481 = vst [vmem:[#allocation2 + $0x190] sm:$0xff] 0.0
        %482 = vst [vmem:[#allocation2 + $0x198] sm:$0xff] 0.0
        %483 = vst [vmem:[#allocation2 + $0x1a0] sm:$0xff] 0.0
        %484 = vst [vmem:[#allocation2 + $0x1a8] sm:$0xff] 0.0
        %485 = vst [vmem:[#allocation2 + $0x1b0] sm:$0xff] 0.0
        %486 = vst [vmem:[#allocation2 + $0x1b8] sm:$0xff] 0.0
        %487 = vst [vmem:[#allocation2 + $0x1c0] sm:$0xff] 0.0
        %488 = vst [vmem:[#allocation2 + $0x1c8] sm:$0xff] 0.0
        %489 = vst [vmem:[#allocation2 + $0x1d0] sm:$0xff] 0.0
        %490 = vst [vmem:[#allocation2 + $0x1d8] sm:$0xff] 0.0
        %491 = vst [vmem:[#allocation2 + $0x1e0] sm:$0xff] 0.0
        %492 = vst [vmem:[#allocation2 + $0x1e8] sm:$0xff] 0.0
        %493 = vst [vmem:[#allocation2 + $0x1f0] sm:$0xff] 0.0
        %494 = vst [vmem:[#allocation2 + $0x1f8] sm:$0xff] 0.0
      $region44: #{_lambda_.1} parent=39 // pred_fallthru
        _
      %v495 = vld [vmem:[#allocation2] sm:$0xff]
      %v496 = vld [vmem:[#allocation2 + $0x8] sm:$0xff]
      %v497 = vld [vmem:[#allocation2 + $0x10] sm:$0xff]
      %v498 = vld [vmem:[#allocation2 + $0x18] sm:$0xff]
      %v499 = vld [vmem:[#allocation2 + $0x20] sm:$0xff]
      %v500 = vld [vmem:[#allocation2 + $0x28] sm:$0xff]
      %v501 = vld [vmem:[#allocation2 + $0x30] sm:$0xff]
      %v502 = vld [vmem:[#allocation2 + $0x38] sm:$0xff]
      %v503 = vld [vmem:[#allocation2 + $0x40] sm:$0xff]
      %v504 = vld [vmem:[#allocation2 + $0x48] sm:$0xff]
      %v505 = vld [vmem:[#allocation2 + $0x50] sm:$0xff]
      %v506 = vld [vmem:[#allocation2 + $0x58] sm:$0xff]
      %v507 = vld [vmem:[#allocation2 + $0x60] sm:$0xff]
      %v508 = vld [vmem:[#allocation2 + $0x68] sm:$0xff]
      %v509 = vld [vmem:[#allocation2 + $0x70] sm:$0xff]
      %v510 = vld [vmem:[#allocation2 + $0x78] sm:$0xff]
      %v511 = vld [vmem:[#allocation2 + $0x80] sm:$0xff]
      %v512 = vld [vmem:[#allocation2 + $0x88] sm:$0xff]
      %v513 = vld [vmem:[#allocation2 + $0x90] sm:$0xff]
      %v514 = vld [vmem:[#allocation2 + $0x98] sm:$0xff]
      %v515 = vld [vmem:[#allocation2 + $0xa0] sm:$0xff]
      %v516 = vld [vmem:[#allocation2 + $0xa8] sm:$0xff]
      %v517 = vld [vmem:[#allocation2 + $0xb0] sm:$0xff]
      %v518 = vld [vmem:[#allocation2 + $0xb8] sm:$0xff]
      %v519 = vld [vmem:[#allocation2 + $0xc0] sm:$0xff]
      %v520 = vld [vmem:[#allocation2 + $0xc8] sm:$0xff]
      %v521 = vld [vmem:[#allocation2 + $0xd0] sm:$0xff]
      %v522 = vld [vmem:[#allocation2 + $0xd8] sm:$0xff]
      %v523 = vld [vmem:[#allocation2 + $0xe0] sm:$0xff]
      %v524 = vld [vmem:[#allocation2 + $0xe8] sm:$0xff]
      %v525 = vld [vmem:[#allocation2 + $0xf0] sm:$0xff]
      %v526 = vld [vmem:[#allocation2 + $0xf8] sm:$0xff]
      %v527 = vld [vmem:[#allocation2 + $0x100] sm:$0xff]
      %v528 = vld [vmem:[#allocation2 + $0x108] sm:$0xff]
      %v529 = vld [vmem:[#allocation2 + $0x110] sm:$0xff]
      %v530 = vld [vmem:[#allocation2 + $0x118] sm:$0xff]
      %v531 = vld [vmem:[#allocation2 + $0x120] sm:$0xff]
      %v532 = vld [vmem:[#allocation2 + $0x128] sm:$0xff]
      %v533 = vld [vmem:[#allocation2 + $0x130] sm:$0xff]
      %v534 = vld [vmem:[#allocation2 + $0x138] sm:$0xff]
      %v535 = vld [vmem:[#allocation2 + $0x140] sm:$0xff]
      %v536 = vld [vmem:[#allocation2 + $0x148] sm:$0xff]
      %v537 = vld [vmem:[#allocation2 + $0x150] sm:$0xff]
      %v538 = vld [vmem:[#allocation2 + $0x158] sm:$0xff]
      %v539 = vld [vmem:[#allocation2 + $0x160] sm:$0xff]
      %v540 = vld [vmem:[#allocation2 + $0x168] sm:$0xff]
      %v541 = vld [vmem:[#allocation2 + $0x170] sm:$0xff]
      %v542 = vld [vmem:[#allocation2 + $0x178] sm:$0xff]
      %v543 = vld [vmem:[#allocation2 + $0x180] sm:$0xff]
      %v544 = vld [vmem:[#allocation2 + $0x188] sm:$0xff]
      %v545 = vld [vmem:[#allocation2 + $0x190] sm:$0xff]
      %v546 = vld [vmem:[#allocation2 + $0x198] sm:$0xff]
      %v547 = vld [vmem:[#allocation2 + $0x1a0] sm:$0xff]
      %v548 = vld [vmem:[#allocation2 + $0x1a8] sm:$0xff]
      %v549 = vld [vmem:[#allocation2 + $0x1b0] sm:$0xff]
      %v550 = vld [vmem:[#allocation2 + $0x1b8] sm:$0xff]
      %v551 = vld [vmem:[#allocation2 + $0x1c0] sm:$0xff]
      %v552 = vld [vmem:[#allocation2 + $0x1c8] sm:$0xff]
      %v553 = vld [vmem:[#allocation2 + $0x1d0] sm:$0xff]
      %v554 = vld [vmem:[#allocation2 + $0x1d8] sm:$0xff]
      %v555 = vld [vmem:[#allocation2 + $0x1e0] sm:$0xff]
      %v556 = vld [vmem:[#allocation2 + $0x1e8] sm:$0xff]
      %v557 = vld [vmem:[#allocation2 + $0x1f0] sm:$0xff]
      %v558 = vld [vmem:[#allocation2 + $0x1f8] sm:$0xff]
      %v559 = vld [vmem:[%s380] sm:$0xff]
      %v560 = vld [vmem:[%s380 + $0x8] sm:$0xf]
      %v561 = vld [vmem:[%s380 + $0xc] sm:$0xff]
      %v562 = vld [vmem:[%s380 + $0x14] sm:$0xf]
      %v563 = vld [vmem:[%s380 + $0x18] sm:$0xff]
      %v564 = vld [vmem:[%s380 + $0x20] sm:$0xf]
      %v565 = vld [vmem:[%s380 + $0x24] sm:$0xff]
      %v566 = vld [vmem:[%s380 + $0x2c] sm:$0xf]
      %v567 = vld [vmem:[%s380 + $0x30] sm:$0xff]
      %v568 = vld [vmem:[%s380 + $0x38] sm:$0xf]
      %v569 = vld [vmem:[%s380 + $0x3c] sm:$0xff]
      %v570 = vld [vmem:[%s380 + $0x44] sm:$0xf]
      %v571 = vld [vmem:[%s380 + $0x48] sm:$0xff]
      %v572 = vld [vmem:[%s380 + $0x50] sm:$0xf]
      %v573 = vld [vmem:[%s380 + $0x54] sm:$0xff]
      %v574 = vld [vmem:[%s380 + $0x5c] sm:$0xf]
      %v575 = vld [vmem:[%s380 + $0x60] sm:$0xff]
      %v576 = vld [vmem:[%s380 + $0x68] sm:$0xf]
      %v577 = vld [vmem:[%s380 + $0x6c] sm:$0xff]
      %v578 = vld [vmem:[%s380 + $0x74] sm:$0xf]
      %v579 = vld [vmem:[%s380 + $0x78] sm:$0xff]
      %v580 = vld [vmem:[%s380 + $0x80] sm:$0xf]
      %v581 = vld [vmem:[%s380 + $0x84] sm:$0xff]
      %v582 = vld [vmem:[%s380 + $0x8c] sm:$0xf]
      %v583 = vld [vmem:[%s380 + $0x90] sm:$0xff]
      %v584 = vld [vmem:[%s380 + $0x98] sm:$0xf]
      %v585 = vld [vmem:[%s380 + $0x9c] sm:$0xff]
      %v586 = vld [vmem:[%s380 + $0xa4] sm:$0xf]
      %v587 = vld [vmem:[%s380 + $0xa8] sm:$0xff]
      %v588 = vld [vmem:[%s380 + $0xb0] sm:$0xf]
      %v589 = vld [vmem:[%s380 + $0xb4] sm:$0xff]
      %v590 = vld [vmem:[%s380 + $0xbc] sm:$0xf]
      %v591 = vld [vmem:[%s380 + $0xc0] sm:$0xff]
      %v592 = vld [vmem:[%s380 + $0xc8] sm:$0xf]
      %v593 = vld [vmem:[%s380 + $0xcc] sm:$0xff]
      %v594 = vld [vmem:[%s380 + $0xd4] sm:$0xf]
      %v595 = vld [vmem:[%s380 + $0xd8] sm:$0xff]
      %v596 = vld [vmem:[%s380 + $0xe0] sm:$0xf]
      %v597 = vld [vmem:[%s380 + $0xe4] sm:$0xff]
      %v598 = vld [vmem:[%s380 + $0xec] sm:$0xf]
      %v599 = vld [vmem:[%s380 + $0xf0] sm:$0xff]
      %v600 = vld [vmem:[%s380 + $0xf8] sm:$0xf]
      %v601 = vld [vmem:[%s380 + $0xfc] sm:$0xff]
      %v602 = vld [vmem:[%s380 + $0x104] sm:$0xf]
      %v603 = vld [vmem:[%s380 + $0x108] sm:$0xff]
      %v604 = vld [vmem:[%s380 + $0x110] sm:$0xf]
      %v605 = vld [vmem:[%s380 + $0x114] sm:$0xff]
      %v606 = vld [vmem:[%s380 + $0x11c] sm:$0xf]
      %v607 = vld [vmem:[%s380 + $0x120] sm:$0xff]
      %v608 = vld [vmem:[%s380 + $0x128] sm:$0xf]
      %v609 = vld [vmem:[%s380 + $0x12c] sm:$0xff]
      %v610 = vld [vmem:[%s380 + $0x134] sm:$0xf]
      %v611 = vld [vmem:[%s380 + $0x138] sm:$0xff]
      %v612 = vld [vmem:[%s380 + $0x140] sm:$0xf]
      %v613 = vld [vmem:[%s380 + $0x144] sm:$0xff]
      %v614 = vld [vmem:[%s380 + $0x14c] sm:$0xf]
      %v615 = vld [vmem:[%s380 + $0x150] sm:$0xff]
      %v616 = vld [vmem:[%s380 + $0x158] sm:$0xf]
      %v617 = vld [vmem:[%s380 + $0x15c] sm:$0xff]
      %v618 = vld [vmem:[%s380 + $0x164] sm:$0xf]
      %v619 = vld [vmem:[%s380 + $0x168] sm:$0xff]
      %v620 = vld [vmem:[%s380 + $0x170] sm:$0xf]
      %v621 = vld [vmem:[%s380 + $0x174] sm:$0xff]
      %v622 = vld [vmem:[%s380 + $0x17c] sm:$0xf]
      %v623 = vld [vmem:[%s380 + $0x180] sm:$0xff]
      %v624 = vld [vmem:[%s380 + $0x188] sm:$0xf]
      %v625 = vld [vmem:[%s380 + $0x18c] sm:$0xff]
      %v626 = vld [vmem:[%s380 + $0x194] sm:$0xf]
      %v627 = vld [vmem:[%s380 + $0x198] sm:$0xff]
      %v628 = vld [vmem:[%s380 + $0x1a0] sm:$0xf]
      %v629 = vld [vmem:[%s380 + $0x1a4] sm:$0xff]
      %v630 = vld [vmem:[%s380 + $0x1ac] sm:$0xf]
      %v631 = vld [vmem:[%s380 + $0x1b0] sm:$0xff]
      %v632 = vld [vmem:[%s380 + $0x1b8] sm:$0xf]
      %v633 = vld [vmem:[%s380 + $0x1bc] sm:$0xff]
      %v634 = vld [vmem:[%s380 + $0x1c4] sm:$0xf]
      %v635 = vld [vmem:[%s380 + $0x1c8] sm:$0xff]
      %v636 = vld [vmem:[%s380 + $0x1d0] sm:$0xf]
      %v637 = vld [vmem:[%s380 + $0x1d4] sm:$0xff]
      %v638 = vld [vmem:[%s380 + $0x1dc] sm:$0xf]
      %v639 = vld [vmem:[%s380 + $0x1e0] sm:$0xff]
      %v640 = vld [vmem:[%s380 + $0x1e8] sm:$0xf]
      %v641 = vld [vmem:[%s380 + $0x1ec] sm:$0xff]
      %v642 = vld [vmem:[%s380 + $0x1f4] sm:$0xf]
      %v643 = vld [vmem:[%s380 + $0x1f8] sm:$0xff]
      %v644 = vld [vmem:[%s380 + $0x200] sm:$0xf]
      %v645 = vld [vmem:[%s380 + $0x204] sm:$0xff]
      %v646 = vld [vmem:[%s380 + $0x20c] sm:$0xf]
      %v647 = vld [vmem:[%s380 + $0x210] sm:$0xff]
      %v648 = vld [vmem:[%s380 + $0x218] sm:$0xf]
      %v649 = vld [vmem:[%s380 + $0x21c] sm:$0xff]
      %v650 = vld [vmem:[%s380 + $0x224] sm:$0xf]
      %v651 = vld [vmem:[%s380 + $0x228] sm:$0xff]
      %v652 = vld [vmem:[%s380 + $0x230] sm:$0xf]
      %v653 = vld [vmem:[%s380 + $0x234] sm:$0xff]
      %v654 = vld [vmem:[%s380 + $0x23c] sm:$0xf]
      %v655 = vld [vmem:[%s380 + $0x240] sm:$0xff]
      %v656 = vld [vmem:[%s380 + $0x248] sm:$0xf]
      %v657 = vld [vmem:[%s380 + $0x24c] sm:$0xff]
      %v658 = vld [vmem:[%s380 + $0x254] sm:$0xf]
      %v659 = vld [vmem:[%s380 + $0x258] sm:$0xff]
      %v660 = vld [vmem:[%s380 + $0x260] sm:$0xf]
      %v661 = vld [vmem:[%s380 + $0x264] sm:$0xff]
      %v662 = vld [vmem:[%s380 + $0x26c] sm:$0xf]
      %v663 = vld [vmem:[%s380 + $0x270] sm:$0xff]
      %v664 = vld [vmem:[%s380 + $0x278] sm:$0xf]
      %v665 = vld [vmem:[%s380 + $0x27c] sm:$0xff]
      %v666 = vld [vmem:[%s380 + $0x284] sm:$0xf]
      %v667 = vld [vmem:[%s380 + $0x288] sm:$0xff]
      %v668 = vld [vmem:[%s380 + $0x290] sm:$0xf]
      %v669 = vld [vmem:[%s380 + $0x294] sm:$0xff]
      %v670 = vld [vmem:[%s380 + $0x29c] sm:$0xf]
      %v671 = vld [vmem:[%s380 + $0x2a0] sm:$0xff]
      %v672 = vld [vmem:[%s380 + $0x2a8] sm:$0xf]
      %v673 = vld [vmem:[%s380 + $0x2ac] sm:$0xff]
      %v674 = vld [vmem:[%s380 + $0x2b4] sm:$0xf]
      %v675 = vld [vmem:[%s380 + $0x2b8] sm:$0xff]
      %v676 = vld [vmem:[%s380 + $0x2c0] sm:$0xf]
      %v677 = vld [vmem:[%s380 + $0x2c4] sm:$0xff]
      %v678 = vld [vmem:[%s380 + $0x2cc] sm:$0xf]
      %v679 = vld [vmem:[%s380 + $0x2d0] sm:$0xff]
      %v680 = vld [vmem:[%s380 + $0x2d8] sm:$0xf]
      %v681 = vld [vmem:[%s380 + $0x2dc] sm:$0xff]
      %v682 = vld [vmem:[%s380 + $0x2e4] sm:$0xf]
      %v683 = vld [vmem:[%s380 + $0x2e8] sm:$0xff]
      %v684 = vld [vmem:[%s380 + $0x2f0] sm:$0xf]
      %v685 = vld [vmem:[%s380 + $0x2f4] sm:$0xff]
      %v686 = vld [vmem:[%s380 + $0x2fc] sm:$0xf]
      %v687 = vld [vmem:[%s394] sm:$0xf]
      %v688 = vld [vmem:[%s394 + $0x4] sm:$0xf]
      %v689 = vld [vmem:[%s394 + $0x8] sm:$0xf]
      %v690 = vld [vmem:[%s394 + $0xc] sm:$0xf]
      %v691 = vld [vmem:[%s394 + $0x10] sm:$0xf]
      %v692 = vld [vmem:[%s394 + $0x14] sm:$0xf]
      %v693 = vld [vmem:[%s394 + $0x18] sm:$0xf]
      %v694 = vld [vmem:[%s394 + $0x1c] sm:$0xf]
      %v695 = vld [vmem:[%s394 + $0x20] sm:$0xf]
      %v696 = vld [vmem:[%s394 + $0x24] sm:$0xf]
      %v697 = vld [vmem:[%s394 + $0x28] sm:$0xf]
      %v698 = vld [vmem:[%s394 + $0x2c] sm:$0xf]
      %v699 = vld [vmem:[%s394 + $0x30] sm:$0xf]
      %v700 = vld [vmem:[%s394 + $0x34] sm:$0xf]
      %v701 = vld [vmem:[%s394 + $0x38] sm:$0xf]
      %v702 = vld [vmem:[%s394 + $0x3c] sm:$0xf]
      %v703 = vld [vmem:[%s394 + $0x40] sm:$0xf]
      %v704 = vld [vmem:[%s394 + $0x44] sm:$0xf]
      %v705 = vld [vmem:[%s394 + $0x48] sm:$0xf]
      %v706 = vld [vmem:[%s394 + $0x4c] sm:$0xf]
      %v707 = vld [vmem:[%s394 + $0x50] sm:$0xf]
      %v708 = vld [vmem:[%s394 + $0x54] sm:$0xf]
      %v709 = vld [vmem:[%s394 + $0x58] sm:$0xf]
      %v710 = vld [vmem:[%s394 + $0x5c] sm:$0xf]
      %v711 = vld [vmem:[%s394 + $0x60] sm:$0xf]
      %v712 = vld [vmem:[%s394 + $0x64] sm:$0xf]
      %v713 = vld [vmem:[%s394 + $0x68] sm:$0xf]
      %v714 = vld [vmem:[%s394 + $0x6c] sm:$0xf]
      %v715 = vld [vmem:[%s394 + $0x70] sm:$0xf]
      %v716 = vld [vmem:[%s394 + $0x74] sm:$0xf]
      %v717 = vld [vmem:[%s394 + $0x78] sm:$0xf]
      %v718 = vld [vmem:[%s394 + $0x7c] sm:$0xf]
      %v719 = vld [vmem:[%s394 + $0x80] sm:$0xf]
      %v720 = vld [vmem:[%s394 + $0x84] sm:$0xf]
      %v721 = vld [vmem:[%s394 + $0x88] sm:$0xf]
      %v722 = vld [vmem:[%s394 + $0x8c] sm:$0xf]
      %v723 = vld [vmem:[%s394 + $0x90] sm:$0xf]
      %v724 = vld [vmem:[%s394 + $0x94] sm:$0xf]
      %v725 = vld [vmem:[%s394 + $0x98] sm:$0xf]
      %v726 = vld [vmem:[%s394 + $0x9c] sm:$0xf]
      %v727 = vld [vmem:[%s394 + $0xa0] sm:$0xf]
      %v728 = vld [vmem:[%s394 + $0xa4] sm:$0xf]
      %v729 = vld [vmem:[%s394 + $0xa8] sm:$0xf]
      %v730 = vld [vmem:[%s394 + $0xac] sm:$0xf]
      %v731 = vld [vmem:[%s394 + $0xb0] sm:$0xf]
      %v732 = vld [vmem:[%s394 + $0xb4] sm:$0xf]
      %v733 = vld [vmem:[%s394 + $0xb8] sm:$0xf]
      %v734 = vld [vmem:[%s394 + $0xbc] sm:$0xf]
      %v863 = vunpack.c.l.b16 %v559
      %v864 = vunpack.c.h.b16 %v559
      %v865 = vunpack.c.l.b16 %v560
      %v866 = vunpack.c.l.b16 %v561
      %v867 = vunpack.c.h.b16 %v561
      %v868 = vunpack.c.l.b16 %v562
      %v869 = vunpack.c.l.b16 %v563
      %v870 = vunpack.c.h.b16 %v563
      %v871 = vunpack.c.l.b16 %v564
      %v872 = vunpack.c.l.b16 %v565
      %v873 = vunpack.c.h.b16 %v565
      %v874 = vunpack.c.l.b16 %v566
      %v875 = vunpack.c.l.b16 %v567
      %v876 = vunpack.c.h.b16 %v567
      %v877 = vunpack.c.l.b16 %v568
      %v878 = vunpack.c.l.b16 %v569
      %v879 = vunpack.c.h.b16 %v569
      %v880 = vunpack.c.l.b16 %v570
      %v881 = vunpack.c.l.b16 %v571
      %v882 = vunpack.c.h.b16 %v571
      %v883 = vunpack.c.l.b16 %v572
      %v884 = vunpack.c.l.b16 %v573
      %v885 = vunpack.c.h.b16 %v573
      %v886 = vunpack.c.l.b16 %v574
      %v887 = vunpack.c.l.b16 %v575
      %v888 = vunpack.c.h.b16 %v575
      %v889 = vunpack.c.l.b16 %v576
      %v890 = vunpack.c.l.b16 %v577
      %v891 = vunpack.c.h.b16 %v577
      %v892 = vunpack.c.l.b16 %v578
      %v893 = vunpack.c.l.b16 %v579
      %v894 = vunpack.c.h.b16 %v579
      %v895 = vunpack.c.l.b16 %v580
      %v896 = vunpack.c.l.b16 %v581
      %v897 = vunpack.c.h.b16 %v581
      %v898 = vunpack.c.l.b16 %v582
      %v899 = vunpack.c.l.b16 %v583
      %v900 = vunpack.c.h.b16 %v583
      %v901 = vunpack.c.l.b16 %v584
      %v902 = vunpack.c.l.b16 %v585
      %v903 = vunpack.c.h.b16 %v585
      %v904 = vunpack.c.l.b16 %v586
      %v905 = vunpack.c.l.b16 %v587
      %v906 = vunpack.c.h.b16 %v587
      %v907 = vunpack.c.l.b16 %v588
      %v908 = vunpack.c.l.b16 %v589
      %v909 = vunpack.c.h.b16 %v589
      %v910 = vunpack.c.l.b16 %v590
      %v911 = vunpack.c.l.b16 %v591
      %v912 = vunpack.c.h.b16 %v591
      %v913 = vunpack.c.l.b16 %v592
      %v914 = vunpack.c.l.b16 %v593
      %v915 = vunpack.c.h.b16 %v593
      %v916 = vunpack.c.l.b16 %v594
      %v917 = vunpack.c.l.b16 %v595
      %v918 = vunpack.c.h.b16 %v595
      %v919 = vunpack.c.l.b16 %v596
      %v920 = vunpack.c.l.b16 %v597
      %v921 = vunpack.c.h.b16 %v597
      %v922 = vunpack.c.l.b16 %v598
      %v923 = vunpack.c.l.b16 %v599
      %v924 = vunpack.c.h.b16 %v599
      %v925 = vunpack.c.l.b16 %v600
      %v926 = vunpack.c.l.b16 %v601
      %v927 = vunpack.c.h.b16 %v601
      %v928 = vunpack.c.l.b16 %v602
      %v929 = vunpack.c.l.b16 %v603
      %v930 = vunpack.c.h.b16 %v603
      %v931 = vunpack.c.l.b16 %v604
      %v932 = vunpack.c.l.b16 %v605
      %v933 = vunpack.c.h.b16 %v605
      %v934 = vunpack.c.l.b16 %v606
      %v935 = vunpack.c.l.b16 %v607
      %v936 = vunpack.c.h.b16 %v607
      %v937 = vunpack.c.l.b16 %v608
      %v938 = vunpack.c.l.b16 %v609
      %v939 = vunpack.c.h.b16 %v609
      %v940 = vunpack.c.l.b16 %v610
      %v941 = vunpack.c.l.b16 %v611
      %v942 = vunpack.c.h.b16 %v611
      %v943 = vunpack.c.l.b16 %v612
      %v944 = vunpack.c.l.b16 %v613
      %v945 = vunpack.c.h.b16 %v613
      %v946 = vunpack.c.l.b16 %v614
      %v947 = vunpack.c.l.b16 %v615
      %v948 = vunpack.c.h.b16 %v615
      %v949 = vunpack.c.l.b16 %v616
      %v950 = vunpack.c.l.b16 %v617
      %v951 = vunpack.c.h.b16 %v617
      %v952 = vunpack.c.l.b16 %v618
      %v953 = vunpack.c.l.b16 %v619
      %v954 = vunpack.c.h.b16 %v619
      %v955 = vunpack.c.l.b16 %v620
      %v956 = vunpack.c.l.b16 %v621
      %v957 = vunpack.c.h.b16 %v621
      %v958 = vunpack.c.l.b16 %v622
      %v959 = vunpack.c.l.b16 %v623
      %v960 = vunpack.c.h.b16 %v623
      %v961 = vunpack.c.l.b16 %v624
      %v962 = vunpack.c.l.b16 %v625
      %v963 = vunpack.c.h.b16 %v625
      %v964 = vunpack.c.l.b16 %v626
      %v965 = vunpack.c.l.b16 %v627
      %v966 = vunpack.c.h.b16 %v627
      %v967 = vunpack.c.l.b16 %v628
      %v968 = vunpack.c.l.b16 %v629
      %v969 = vunpack.c.h.b16 %v629
      %v970 = vunpack.c.l.b16 %v630
      %v971 = vunpack.c.l.b16 %v631
      %v972 = vunpack.c.h.b16 %v631
      %v973 = vunpack.c.l.b16 %v632
      %v974 = vunpack.c.l.b16 %v633
      %v975 = vunpack.c.h.b16 %v633
      %v976 = vunpack.c.l.b16 %v634
      %v977 = vunpack.c.l.b16 %v635
      %v978 = vunpack.c.h.b16 %v635
      %v979 = vunpack.c.l.b16 %v636
      %v980 = vunpack.c.l.b16 %v637
      %v981 = vunpack.c.h.b16 %v637
      %v982 = vunpack.c.l.b16 %v638
      %v983 = vunpack.c.l.b16 %v639
      %v984 = vunpack.c.h.b16 %v639
      %v985 = vunpack.c.l.b16 %v640
      %v986 = vunpack.c.l.b16 %v641
      %v987 = vunpack.c.h.b16 %v641
      %v988 = vunpack.c.l.b16 %v642
      %v989 = vunpack.c.l.b16 %v643
      %v990 = vunpack.c.h.b16 %v643
      %v991 = vunpack.c.l.b16 %v644
      %v992 = vunpack.c.l.b16 %v645
      %v993 = vunpack.c.h.b16 %v645
      %v994 = vunpack.c.l.b16 %v646
      %v995 = vunpack.c.l.b16 %v647
      %v996 = vunpack.c.h.b16 %v647
      %v997 = vunpack.c.l.b16 %v648
      %v998 = vunpack.c.l.b16 %v649
      %v999 = vunpack.c.h.b16 %v649
      %v1000 = vunpack.c.l.b16 %v650
      %v1001 = vunpack.c.l.b16 %v651
      %v1002 = vunpack.c.h.b16 %v651
      %v1003 = vunpack.c.l.b16 %v652
      %v1004 = vunpack.c.l.b16 %v653
      %v1005 = vunpack.c.h.b16 %v653
      %v1006 = vunpack.c.l.b16 %v654
      %v1007 = vunpack.c.l.b16 %v655
      %v1008 = vunpack.c.h.b16 %v655
      %v1009 = vunpack.c.l.b16 %v656
      %v1010 = vunpack.c.l.b16 %v657
      %v1011 = vunpack.c.h.b16 %v657
      %v1012 = vunpack.c.l.b16 %v658
      %v1013 = vunpack.c.l.b16 %v659
      %v1014 = vunpack.c.h.b16 %v659
      %v1015 = vunpack.c.l.b16 %v660
      %v1016 = vunpack.c.l.b16 %v661
      %v1017 = vunpack.c.h.b16 %v661
      %v1018 = vunpack.c.l.b16 %v662
      %v1019 = vunpack.c.l.b16 %v663
      %v1020 = vunpack.c.h.b16 %v663
      %v1021 = vunpack.c.l.b16 %v664
      %v1022 = vunpack.c.l.b16 %v665
      %v1023 = vunpack.c.h.b16 %v665
      %v1024 = vunpack.c.l.b16 %v666
      %v1025 = vunpack.c.l.b16 %v667
      %v1026 = vunpack.c.h.b16 %v667
      %v1027 = vunpack.c.l.b16 %v668
      %v1028 = vunpack.c.l.b16 %v669
      %v1029 = vunpack.c.h.b16 %v669
      %v1030 = vunpack.c.l.b16 %v670
      %v1031 = vunpack.c.l.b16 %v671
      %v1032 = vunpack.c.h.b16 %v671
      %v1033 = vunpack.c.l.b16 %v672
      %v1034 = vunpack.c.l.b16 %v673
      %v1035 = vunpack.c.h.b16 %v673
      %v1036 = vunpack.c.l.b16 %v674
      %v1037 = vunpack.c.l.b16 %v675
      %v1038 = vunpack.c.h.b16 %v675
      %v1039 = vunpack.c.l.b16 %v676
      %v1040 = vunpack.c.l.b16 %v677
      %v1041 = vunpack.c.h.b16 %v677
      %v1042 = vunpack.c.l.b16 %v678
      %v1043 = vunpack.c.l.b16 %v679
      %v1044 = vunpack.c.h.b16 %v679
      %v1045 = vunpack.c.l.b16 %v680
      %v1046 = vunpack.c.l.b16 %v681
      %v1047 = vunpack.c.h.b16 %v681
      %v1048 = vunpack.c.l.b16 %v682
      %v1049 = vunpack.c.l.b16 %v683
      %v1050 = vunpack.c.h.b16 %v683
      %v1051 = vunpack.c.l.b16 %v684
      %v1052 = vunpack.c.l.b16 %v685
      %v1053 = vunpack.c.h.b16 %v685
      %v1054 = vunpack.c.l.b16 %v686
      %v1055 = vpack.c.b16 %v866, %v863
      %v1056 = vpack.c.b16 %v867, %v864
      %v1057 = vpack.c.b16 %v868, %v865
      %v1058 = vpack.c.b16 %v872, %v869
      %v1059 = vpack.c.b16 %v873, %v870
      %v1060 = vpack.c.b16 %v874, %v871
      %v1061 = vpack.c.b16 %v878, %v875
      %v1062 = vpack.c.b16 %v879, %v876
      %v1063 = vpack.c.b16 %v880, %v877
      %v1064 = vpack.c.b16 %v884, %v881
      %v1065 = vpack.c.b16 %v885, %v882
      %v1066 = vpack.c.b16 %v886, %v883
      %v1067 = vpack.c.b16 %v890, %v887
      %v1068 = vpack.c.b16 %v891, %v888
      %v1069 = vpack.c.b16 %v892, %v889
      %v1070 = vpack.c.b16 %v896, %v893
      %v1071 = vpack.c.b16 %v897, %v894
      %v1072 = vpack.c.b16 %v898, %v895
      %v1073 = vpack.c.b16 %v902, %v899
      %v1074 = vpack.c.b16 %v903, %v900
      %v1075 = vpack.c.b16 %v904, %v901
      %v1076 = vpack.c.b16 %v908, %v905
      %v1077 = vpack.c.b16 %v909, %v906
      %v1078 = vpack.c.b16 %v910, %v907
      %v1079 = vpack.c.b16 %v914, %v911
      %v1080 = vpack.c.b16 %v915, %v912
      %v1081 = vpack.c.b16 %v916, %v913
      %v1082 = vpack.c.b16 %v920, %v917
      %v1083 = vpack.c.b16 %v921, %v918
      %v1084 = vpack.c.b16 %v922, %v919
      %v1085 = vpack.c.b16 %v926, %v923
      %v1086 = vpack.c.b16 %v927, %v924
      %v1087 = vpack.c.b16 %v928, %v925
      %v1088 = vpack.c.b16 %v932, %v929
      %v1089 = vpack.c.b16 %v933, %v930
      %v1090 = vpack.c.b16 %v934, %v931
      %v1091 = vpack.c.b16 %v938, %v935
      %v1092 = vpack.c.b16 %v939, %v936
      %v1093 = vpack.c.b16 %v940, %v937
      %v1094 = vpack.c.b16 %v944, %v941
      %v1095 = vpack.c.b16 %v945, %v942
      %v1096 = vpack.c.b16 %v946, %v943
      %v1097 = vpack.c.b16 %v950, %v947
      %v1098 = vpack.c.b16 %v951, %v948
      %v1099 = vpack.c.b16 %v952, %v949
      %v1100 = vpack.c.b16 %v956, %v953
      %v1101 = vpack.c.b16 %v957, %v954
      %v1102 = vpack.c.b16 %v958, %v955
      %v1103 = vpack.c.b16 %v962, %v959
      %v1104 = vpack.c.b16 %v963, %v960
      %v1105 = vpack.c.b16 %v964, %v961
      %v1106 = vpack.c.b16 %v968, %v965
      %v1107 = vpack.c.b16 %v969, %v966
      %v1108 = vpack.c.b16 %v970, %v967
      %v1109 = vpack.c.b16 %v974, %v971
      %v1110 = vpack.c.b16 %v975, %v972
      %v1111 = vpack.c.b16 %v976, %v973
      %v1112 = vpack.c.b16 %v980, %v977
      %v1113 = vpack.c.b16 %v981, %v978
      %v1114 = vpack.c.b16 %v982, %v979
      %v1115 = vpack.c.b16 %v986, %v983
      %v1116 = vpack.c.b16 %v987, %v984
      %v1117 = vpack.c.b16 %v988, %v985
      %v1118 = vpack.c.b16 %v992, %v989
      %v1119 = vpack.c.b16 %v993, %v990
      %v1120 = vpack.c.b16 %v994, %v991
      %v1121 = vpack.c.b16 %v998, %v995
      %v1122 = vpack.c.b16 %v999, %v996
      %v1123 = vpack.c.b16 %v1000, %v997
      %v1124 = vpack.c.b16 %v1004, %v1001
      %v1125 = vpack.c.b16 %v1005, %v1002
      %v1126 = vpack.c.b16 %v1006, %v1003
      %v1127 = vpack.c.b16 %v1010, %v1007
      %v1128 = vpack.c.b16 %v1011, %v1008
      %v1129 = vpack.c.b16 %v1012, %v1009
      %v1130 = vpack.c.b16 %v1016, %v1013
      %v1131 = vpack.c.b16 %v1017, %v1014
      %v1132 = vpack.c.b16 %v1018, %v1015
      %v1133 = vpack.c.b16 %v1022, %v1019
      %v1134 = vpack.c.b16 %v1023, %v1020
      %v1135 = vpack.c.b16 %v1024, %v1021
      %v1136 = vpack.c.b16 %v1028, %v1025
      %v1137 = vpack.c.b16 %v1029, %v1026
      %v1138 = vpack.c.b16 %v1030, %v1027
      %v1139 = vpack.c.b16 %v1034, %v1031
      %v1140 = vpack.c.b16 %v1035, %v1032
      %v1141 = vpack.c.b16 %v1036, %v1033
      %v1142 = vpack.c.b16 %v1040, %v1037
      %v1143 = vpack.c.b16 %v1041, %v1038
      %v1144 = vpack.c.b16 %v1042, %v1039
      %v1145 = vpack.c.b16 %v1046, %v1043
      %v1146 = vpack.c.b16 %v1047, %v1044
      %v1147 = vpack.c.b16 %v1048, %v1045
      %v1148 = vpack.c.b16 %v1052, %v1049
      %v1149 = vpack.c.b16 %v1053, %v1050
      %v1150 = vpack.c.b16 %v1054, %v1051
      %v1295 = vunpack.c.l.b16 %v687
      %v1296 = vunpack.c.l.b16 %v688
      %v1297 = vunpack.c.l.b16 %v689
      %v1298 = vunpack.c.l.b16 %v690
      %v1299 = vunpack.c.l.b16 %v691
      %v1300 = vunpack.c.l.b16 %v692
      %v1301 = vunpack.c.l.b16 %v693
      %v1302 = vunpack.c.l.b16 %v694
      %v1303 = vunpack.c.l.b16 %v695
      %v1304 = vunpack.c.l.b16 %v696
      %v1305 = vunpack.c.l.b16 %v697
      %v1306 = vunpack.c.l.b16 %v698
      %v1307 = vunpack.c.l.b16 %v699
      %v1308 = vunpack.c.l.b16 %v700
      %v1309 = vunpack.c.l.b16 %v701
      %v1310 = vunpack.c.l.b16 %v702
      %v1311 = vunpack.c.l.b16 %v703
      %v1312 = vunpack.c.l.b16 %v704
      %v1313 = vunpack.c.l.b16 %v705
      %v1314 = vunpack.c.l.b16 %v706
      %v1315 = vunpack.c.l.b16 %v707
      %v1316 = vunpack.c.l.b16 %v708
      %v1317 = vunpack.c.l.b16 %v709
      %v1318 = vunpack.c.l.b16 %v710
      %v1319 = vunpack.c.l.b16 %v711
      %v1320 = vunpack.c.l.b16 %v712
      %v1321 = vunpack.c.l.b16 %v713
      %v1322 = vunpack.c.l.b16 %v714
      %v1323 = vunpack.c.l.b16 %v715
      %v1324 = vunpack.c.l.b16 %v716
      %v1325 = vunpack.c.l.b16 %v717
      %v1326 = vunpack.c.l.b16 %v718
      %v1327 = vunpack.c.l.b16 %v719
      %v1328 = vunpack.c.l.b16 %v720
      %v1329 = vunpack.c.l.b16 %v721
      %v1330 = vunpack.c.l.b16 %v722
      %v1331 = vunpack.c.l.b16 %v723
      %v1332 = vunpack.c.l.b16 %v724
      %v1333 = vunpack.c.l.b16 %v725
      %v1334 = vunpack.c.l.b16 %v726
      %v1335 = vunpack.c.l.b16 %v727
      %v1336 = vunpack.c.l.b16 %v728
      %v1337 = vunpack.c.l.b16 %v729
      %v1338 = vunpack.c.l.b16 %v730
      %v1339 = vunpack.c.l.b16 %v731
      %v1340 = vunpack.c.l.b16 %v732
      %v1341 = vunpack.c.l.b16 %v733
      %v1342 = vunpack.c.l.b16 %v734
      %v1343 = vpack.c.b16 %v1296, %v1295
      %v1344 = vpack.c.b16 %v1298, %v1297
      %v1345 = vpack.c.b16 %v1300, %v1299
      %v1346 = vpack.c.b16 %v1302, %v1301
      %v1347 = vpack.c.b16 %v1304, %v1303
      %v1348 = vpack.c.b16 %v1306, %v1305
      %v1349 = vpack.c.b16 %v1308, %v1307
      %v1350 = vpack.c.b16 %v1310, %v1309
      %v1351 = vpack.c.b16 %v1312, %v1311
      %v1352 = vpack.c.b16 %v1314, %v1313
      %v1353 = vpack.c.b16 %v1316, %v1315
      %v1354 = vpack.c.b16 %v1318, %v1317
      %v1355 = vpack.c.b16 %v1320, %v1319
      %v1356 = vpack.c.b16 %v1322, %v1321
      %v1357 = vpack.c.b16 %v1324, %v1323
      %v1358 = vpack.c.b16 %v1326, %v1325
      %v1359 = vpack.c.b16 %v1328, %v1327
      %v1360 = vpack.c.b16 %v1330, %v1329
      %v1361 = vpack.c.b16 %v1332, %v1331
      %v1362 = vpack.c.b16 %v1334, %v1333
      %v1363 = vpack.c.b16 %v1336, %v1335
      %v1364 = vpack.c.b16 %v1338, %v1337
      %v1365 = vpack.c.b16 %v1340, %v1339
      %v1366 = vpack.c.b16 %v1342, %v1341
      %1391 = vmatpush.bf16.msra.mxu0 %v1350
      %1392 = vmatpush.bf16.msra.mxu0 %v1349
      %1393 = vmatpush.bf16.msra.mxu0 %v1348
      %1394 = vmatpush.bf16.msra.mxu0 %v1347
      %1395 = vmatpush.bf16.msra.mxu0 %v1346
      %1396 = vmatpush.bf16.msra.mxu0 %v1345
      %1397 = vmatpush.bf16.msra.mxu0 %v1344
      %1398 = vmatpush.bf16.msra.mxu0 %v1343
      %1399 = vmatmul.bf16.gmra.mxu0 %v1055
      %v1400 = vpop.f32.mrf.mxu0
      %v1401 = vadd.f32 0.0, %v1400
      %v1402 = vpop.f32.mrf.mxu0
      %v1403 = vadd.f32 0.0, %v1402
      %1404 = vmatmul.bf16.gmra.mxu0 %v1058
      %v1405 = vpop.f32.mrf.mxu0
      %v1406 = vadd.f32 0.0, %v1405
      %v1407 = vpop.f32.mrf.mxu0
      %v1408 = vadd.f32 0.0, %v1407
      %1409 = vmatmul.bf16.gmra.mxu0 %v1061
      %v1410 = vpop.f32.mrf.mxu0
      %v1411 = vadd.f32 0.0, %v1410
      %v1412 = vpop.f32.mrf.mxu0
      %v1413 = vadd.f32 0.0, %v1412
      %1414 = vmatmul.bf16.gmra.mxu0 %v1064
      %v1415 = vpop.f32.mrf.mxu0
      %v1416 = vadd.f32 0.0, %v1415
      %v1417 = vpop.f32.mrf.mxu0
      %v1418 = vadd.f32 0.0, %v1417
      %1419 = vmatmul.bf16.gmra.mxu0 %v1067
      %v1420 = vpop.f32.mrf.mxu0
      %v1421 = vadd.f32 0.0, %v1420
      %v1422 = vpop.f32.mrf.mxu0
      %v1423 = vadd.f32 0.0, %v1422
      %1424 = vmatmul.bf16.gmra.mxu0 %v1070
      %v1425 = vpop.f32.mrf.mxu0
      %v1426 = vadd.f32 0.0, %v1425
      %v1427 = vpop.f32.mrf.mxu0
      %v1428 = vadd.f32 0.0, %v1427
      %1429 = vmatmul.bf16.gmra.mxu0 %v1073
      %v1430 = vpop.f32.mrf.mxu0
      %v1431 = vadd.f32 0.0, %v1430
      %v1432 = vpop.f32.mrf.mxu0
      %v1433 = vadd.f32 0.0, %v1432
      %1434 = vmatmul.bf16.gmra.mxu0 %v1076
      %v1435 = vpop.f32.mrf.mxu0
      %v1436 = vadd.f32 0.0, %v1435
      %v1437 = vpop.f32.mrf.mxu0
      %v1438 = vadd.f32 0.0, %v1437
      %1439 = vmatmul.bf16.gmra.mxu0 %v1079
      %v1440 = vpop.f32.mrf.mxu0
      %v1441 = vadd.f32 0.0, %v1440
      %v1442 = vpop.f32.mrf.mxu0
      %v1443 = vadd.f32 0.0, %v1442
      %1444 = vmatmul.bf16.gmra.mxu0 %v1082
      %v1445 = vpop.f32.mrf.mxu0
      %v1446 = vadd.f32 0.0, %v1445
      %v1447 = vpop.f32.mrf.mxu0
      %v1448 = vadd.f32 0.0, %v1447
      %1449 = vmatmul.bf16.gmra.mxu0 %v1085
      %v1450 = vpop.f32.mrf.mxu0
      %v1451 = vadd.f32 0.0, %v1450
      %v1452 = vpop.f32.mrf.mxu0
      %v1453 = vadd.f32 0.0, %v1452
      %1454 = vmatmul.bf16.gmra.mxu0 %v1088
      %v1455 = vpop.f32.mrf.mxu0
      %v1456 = vadd.f32 0.0, %v1455
      %v1457 = vpop.f32.mrf.mxu0
      %v1458 = vadd.f32 0.0, %v1457
      %1459 = vmatmul.bf16.gmra.mxu0 %v1091
      %v1460 = vpop.f32.mrf.mxu0
      %v1461 = vadd.f32 0.0, %v1460
      %v1462 = vpop.f32.mrf.mxu0
      %v1463 = vadd.f32 0.0, %v1462
      %1464 = vmatmul.bf16.gmra.mxu0 %v1094
      %v1465 = vpop.f32.mrf.mxu0
      %v1466 = vadd.f32 0.0, %v1465
      %v1467 = vpop.f32.mrf.mxu0
      %v1468 = vadd.f32 0.0, %v1467
      %1469 = vmatmul.bf16.gmra.mxu0 %v1097
      %v1470 = vpop.f32.mrf.mxu0
      %v1471 = vadd.f32 0.0, %v1470
      %v1472 = vpop.f32.mrf.mxu0
      %v1473 = vadd.f32 0.0, %v1472
      %1474 = vmatmul.bf16.gmra.mxu0 %v1100
      %v1475 = vpop.f32.mrf.mxu0
      %v1476 = vadd.f32 0.0, %v1475
      %v1477 = vpop.f32.mrf.mxu0
      %v1478 = vadd.f32 0.0, %v1477
      %1479 = vmatmul.bf16.gmra.mxu0 %v1103
      %v1480 = vpop.f32.mrf.mxu0
      %v1481 = vadd.f32 0.0, %v1480
      %v1482 = vpop.f32.mrf.mxu0
      %v1483 = vadd.f32 0.0, %v1482
      %1484 = vmatmul.bf16.gmra.mxu0 %v1106
      %v1485 = vpop.f32.mrf.mxu0
      %v1486 = vadd.f32 0.0, %v1485
      %v1487 = vpop.f32.mrf.mxu0
      %v1488 = vadd.f32 0.0, %v1487
      %1489 = vmatmul.bf16.gmra.mxu0 %v1109
      %v1490 = vpop.f32.mrf.mxu0
      %v1491 = vadd.f32 0.0, %v1490
      %v1492 = vpop.f32.mrf.mxu0
      %v1493 = vadd.f32 0.0, %v1492
      %1494 = vmatmul.bf16.gmra.mxu0 %v1112
      %v1495 = vpop.f32.mrf.mxu0
      %v1496 = vadd.f32 0.0, %v1495
      %v1497 = vpop.f32.mrf.mxu0
      %v1498 = vadd.f32 0.0, %v1497
      %1499 = vmatmul.bf16.gmra.mxu0 %v1115
      %v1500 = vpop.f32.mrf.mxu0
      %v1501 = vadd.f32 0.0, %v1500
      %v1502 = vpop.f32.mrf.mxu0
      %v1503 = vadd.f32 0.0, %v1502
      %1504 = vmatmul.bf16.gmra.mxu0 %v1118
      %v1505 = vpop.f32.mrf.mxu0
      %v1506 = vadd.f32 0.0, %v1505
      %v1507 = vpop.f32.mrf.mxu0
      %v1508 = vadd.f32 0.0, %v1507
      %1509 = vmatmul.bf16.gmra.mxu0 %v1121
      %v1510 = vpop.f32.mrf.mxu0
      %v1511 = vadd.f32 0.0, %v1510
      %v1512 = vpop.f32.mrf.mxu0
      %v1513 = vadd.f32 0.0, %v1512
      %1514 = vmatmul.bf16.gmra.mxu0 %v1124
      %v1515 = vpop.f32.mrf.mxu0
      %v1516 = vadd.f32 0.0, %v1515
      %v1517 = vpop.f32.mrf.mxu0
      %v1518 = vadd.f32 0.0, %v1517
      %1519 = vmatmul.bf16.gmra.mxu0 %v1127
      %v1520 = vpop.f32.mrf.mxu0
      %v1521 = vadd.f32 0.0, %v1520
      %v1522 = vpop.f32.mrf.mxu0
      %v1523 = vadd.f32 0.0, %v1522
      %1524 = vmatmul.bf16.gmra.mxu0 %v1130
      %v1525 = vpop.f32.mrf.mxu0
      %v1526 = vadd.f32 0.0, %v1525
      %v1527 = vpop.f32.mrf.mxu0
      %v1528 = vadd.f32 0.0, %v1527
      %1529 = vmatmul.bf16.gmra.mxu0 %v1133
      %v1530 = vpop.f32.mrf.mxu0
      %v1531 = vadd.f32 0.0, %v1530
      %v1532 = vpop.f32.mrf.mxu0
      %v1533 = vadd.f32 0.0, %v1532
      %1534 = vmatmul.bf16.gmra.mxu0 %v1136
      %v1535 = vpop.f32.mrf.mxu0
      %v1536 = vadd.f32 0.0, %v1535
      %v1537 = vpop.f32.mrf.mxu0
      %v1538 = vadd.f32 0.0, %v1537
      %1539 = vmatmul.bf16.gmra.mxu0 %v1139
      %v1540 = vpop.f32.mrf.mxu0
      %v1541 = vadd.f32 0.0, %v1540
      %v1542 = vpop.f32.mrf.mxu0
      %v1543 = vadd.f32 0.0, %v1542
      %1544 = vmatmul.bf16.gmra.mxu0 %v1142
      %v1545 = vpop.f32.mrf.mxu0
      %v1546 = vadd.f32 0.0, %v1545
      %v1547 = vpop.f32.mrf.mxu0
      %v1548 = vadd.f32 0.0, %v1547
      %1549 = vmatmul.bf16.gmra.mxu0 %v1145
      %v1550 = vpop.f32.mrf.mxu0
      %v1551 = vadd.f32 0.0, %v1550
      %v1552 = vpop.f32.mrf.mxu0
      %v1553 = vadd.f32 0.0, %v1552
      %1554 = vmatmul.bf16.gmra.mxu0 %v1148
      %v1555 = vpop.f32.mrf.mxu0
      %v1556 = vadd.f32 0.0, %v1555
      %v1557 = vpop.f32.mrf.mxu0
      %v1558 = vadd.f32 0.0, %v1557
      %1559 = vdwg.mxu0
      %1560 = vmatpush.bf16.msra.mxu0 %v1358
      %1561 = vmatpush.bf16.msra.mxu0 %v1357
      %1562 = vmatpush.bf16.msra.mxu0 %v1356
      %1563 = vmatpush.bf16.msra.mxu0 %v1355
      %1564 = vmatpush.bf16.msra.mxu0 %v1354
      %1565 = vmatpush.bf16.msra.mxu0 %v1353
      %1566 = vmatpush.bf16.msra.mxu0 %v1352
      %1567 = vmatpush.bf16.msra.mxu0 %v1351
      %1568 = vmatmul.bf16.gmra.mxu0 %v1056
      %v1569 = vpop.f32.mrf.mxu0
      %v1570 = vadd.f32 %v1401, %v1569
      %v1571 = vpop.f32.mrf.mxu0
      %v1572 = vadd.f32 %v1403, %v1571
      %1573 = vmatmul.bf16.gmra.mxu0 %v1059
      %v1574 = vpop.f32.mrf.mxu0
      %v1575 = vadd.f32 %v1406, %v1574
      %v1576 = vpop.f32.mrf.mxu0
      %v1577 = vadd.f32 %v1408, %v1576
      %1578 = vmatmul.bf16.gmra.mxu0 %v1062
      %v1579 = vpop.f32.mrf.mxu0
      %v1580 = vadd.f32 %v1411, %v1579
      %v1581 = vpop.f32.mrf.mxu0
      %v1582 = vadd.f32 %v1413, %v1581
      %1583 = vmatmul.bf16.gmra.mxu0 %v1065
      %v1584 = vpop.f32.mrf.mxu0
      %v1585 = vadd.f32 %v1416, %v1584
      %v1586 = vpop.f32.mrf.mxu0
      %v1587 = vadd.f32 %v1418, %v1586
      %1588 = vmatmul.bf16.gmra.mxu0 %v1068
      %v1589 = vpop.f32.mrf.mxu0
      %v1590 = vadd.f32 %v1421, %v1589
      %v1591 = vpop.f32.mrf.mxu0
      %v1592 = vadd.f32 %v1423, %v1591
      %1593 = vmatmul.bf16.gmra.mxu0 %v1071
      %v1594 = vpop.f32.mrf.mxu0
      %v1595 = vadd.f32 %v1426, %v1594
      %v1596 = vpop.f32.mrf.mxu0
      %v1597 = vadd.f32 %v1428, %v1596
      %1598 = vmatmul.bf16.gmra.mxu0 %v1074
      %v1599 = vpop.f32.mrf.mxu0
      %v1600 = vadd.f32 %v1431, %v1599
      %v1601 = vpop.f32.mrf.mxu0
      %v1602 = vadd.f32 %v1433, %v1601
      %1603 = vmatmul.bf16.gmra.mxu0 %v1077
      %v1604 = vpop.f32.mrf.mxu0
      %v1605 = vadd.f32 %v1436, %v1604
      %v1606 = vpop.f32.mrf.mxu0
      %v1607 = vadd.f32 %v1438, %v1606
      %1608 = vmatmul.bf16.gmra.mxu0 %v1080
      %v1609 = vpop.f32.mrf.mxu0
      %v1610 = vadd.f32 %v1441, %v1609
      %v1611 = vpop.f32.mrf.mxu0
      %v1612 = vadd.f32 %v1443, %v1611
      %1613 = vmatmul.bf16.gmra.mxu0 %v1083
      %v1614 = vpop.f32.mrf.mxu0
      %v1615 = vadd.f32 %v1446, %v1614
      %v1616 = vpop.f32.mrf.mxu0
      %v1617 = vadd.f32 %v1448, %v1616
      %1618 = vmatmul.bf16.gmra.mxu0 %v1086
      %v1619 = vpop.f32.mrf.mxu0
      %v1620 = vadd.f32 %v1451, %v1619
      %v1621 = vpop.f32.mrf.mxu0
      %v1622 = vadd.f32 %v1453, %v1621
      %1623 = vmatmul.bf16.gmra.mxu0 %v1089
      %v1624 = vpop.f32.mrf.mxu0
      %v1625 = vadd.f32 %v1456, %v1624
      %v1626 = vpop.f32.mrf.mxu0
      %v1627 = vadd.f32 %v1458, %v1626
      %1628 = vmatmul.bf16.gmra.mxu0 %v1092
      %v1629 = vpop.f32.mrf.mxu0
      %v1630 = vadd.f32 %v1461, %v1629
      %v1631 = vpop.f32.mrf.mxu0
      %v1632 = vadd.f32 %v1463, %v1631
      %1633 = vmatmul.bf16.gmra.mxu0 %v1095
      %v1634 = vpop.f32.mrf.mxu0
      %v1635 = vadd.f32 %v1466, %v1634
      %v1636 = vpop.f32.mrf.mxu0
      %v1637 = vadd.f32 %v1468, %v1636
      %1638 = vmatmul.bf16.gmra.mxu0 %v1098
      %v1639 = vpop.f32.mrf.mxu0
      %v1640 = vadd.f32 %v1471, %v1639
      %v1641 = vpop.f32.mrf.mxu0
      %v1642 = vadd.f32 %v1473, %v1641
      %1643 = vmatmul.bf16.gmra.mxu0 %v1101
      %v1644 = vpop.f32.mrf.mxu0
      %v1645 = vadd.f32 %v1476, %v1644
      %v1646 = vpop.f32.mrf.mxu0
      %v1647 = vadd.f32 %v1478, %v1646
      %1648 = vmatmul.bf16.gmra.mxu0 %v1104
      %v1649 = vpop.f32.mrf.mxu0
      %v1650 = vadd.f32 %v1481, %v1649
      %v1651 = vpop.f32.mrf.mxu0
      %v1652 = vadd.f32 %v1483, %v1651
      %1653 = vmatmul.bf16.gmra.mxu0 %v1107
      %v1654 = vpop.f32.mrf.mxu0
      %v1655 = vadd.f32 %v1486, %v1654
      %v1656 = vpop.f32.mrf.mxu0
      %v1657 = vadd.f32 %v1488, %v1656
      %1658 = vmatmul.bf16.gmra.mxu0 %v1110
      %v1659 = vpop.f32.mrf.mxu0
      %v1660 = vadd.f32 %v1491, %v1659
      %v1661 = vpop.f32.mrf.mxu0
      %v1662 = vadd.f32 %v1493, %v1661
      %1663 = vmatmul.bf16.gmra.mxu0 %v1113
      %v1664 = vpop.f32.mrf.mxu0
      %v1665 = vadd.f32 %v1496, %v1664
      %v1666 = vpop.f32.mrf.mxu0
      %v1667 = vadd.f32 %v1498, %v1666
      %1668 = vmatmul.bf16.gmra.mxu0 %v1116
      %v1669 = vpop.f32.mrf.mxu0
      %v1670 = vadd.f32 %v1501, %v1669
      %v1671 = vpop.f32.mrf.mxu0
      %v1672 = vadd.f32 %v1503, %v1671
      %1673 = vmatmul.bf16.gmra.mxu0 %v1119
      %v1674 = vpop.f32.mrf.mxu0
      %v1675 = vadd.f32 %v1506, %v1674
      %v1676 = vpop.f32.mrf.mxu0
      %v1677 = vadd.f32 %v1508, %v1676
      %1678 = vmatmul.bf16.gmra.mxu0 %v1122
      %v1679 = vpop.f32.mrf.mxu0
      %v1680 = vadd.f32 %v1511, %v1679
      %v1681 = vpop.f32.mrf.mxu0
      %v1682 = vadd.f32 %v1513, %v1681
      %1683 = vmatmul.bf16.gmra.mxu0 %v1125
      %v1684 = vpop.f32.mrf.mxu0
      %v1685 = vadd.f32 %v1516, %v1684
      %v1686 = vpop.f32.mrf.mxu0
      %v1687 = vadd.f32 %v1518, %v1686
      %1688 = vmatmul.bf16.gmra.mxu0 %v1128
      %v1689 = vpop.f32.mrf.mxu0
      %v1690 = vadd.f32 %v1521, %v1689
      %v1691 = vpop.f32.mrf.mxu0
      %v1692 = vadd.f32 %v1523, %v1691
      %1693 = vmatmul.bf16.gmra.mxu0 %v1131
      %v1694 = vpop.f32.mrf.mxu0
      %v1695 = vadd.f32 %v1526, %v1694
      %v1696 = vpop.f32.mrf.mxu0
      %v1697 = vadd.f32 %v1528, %v1696
      %1698 = vmatmul.bf16.gmra.mxu0 %v1134
      %v1699 = vpop.f32.mrf.mxu0
      %v1700 = vadd.f32 %v1531, %v1699
      %v1701 = vpop.f32.mrf.mxu0
      %v1702 = vadd.f32 %v1533, %v1701
      %1703 = vmatmul.bf16.gmra.mxu0 %v1137
      %v1704 = vpop.f32.mrf.mxu0
      %v1705 = vadd.f32 %v1536, %v1704
      %v1706 = vpop.f32.mrf.mxu0
      %v1707 = vadd.f32 %v1538, %v1706
      %1708 = vmatmul.bf16.gmra.mxu0 %v1140
      %v1709 = vpop.f32.mrf.mxu0
      %v1710 = vadd.f32 %v1541, %v1709
      %v1711 = vpop.f32.mrf.mxu0
      %v1712 = vadd.f32 %v1543, %v1711
      %1713 = vmatmul.bf16.gmra.mxu0 %v1143
      %v1714 = vpop.f32.mrf.mxu0
      %v1715 = vadd.f32 %v1546, %v1714
      %v1716 = vpop.f32.mrf.mxu0
      %v1717 = vadd.f32 %v1548, %v1716
      %1718 = vmatmul.bf16.gmra.mxu0 %v1146
      %v1719 = vpop.f32.mrf.mxu0
      %v1720 = vadd.f32 %v1551, %v1719
      %v1721 = vpop.f32.mrf.mxu0
      %v1722 = vadd.f32 %v1553, %v1721
      %1723 = vmatmul.bf16.gmra.mxu0 %v1149
      %v1724 = vpop.f32.mrf.mxu0
      %v1725 = vadd.f32 %v1556, %v1724
      %v1726 = vpop.f32.mrf.mxu0
      %v1727 = vadd.f32 %v1558, %v1726
      %1728 = vdwg.mxu0
      %1729 = vmatpush.bf16.msra.mxu0 %v1366
      %1730 = vmatpush.bf16.msra.mxu0 %v1365
      %1731 = vmatpush.bf16.msra.mxu0 %v1364
      %1732 = vmatpush.bf16.msra.mxu0 %v1363
      %1733 = vmatpush.bf16.msra.mxu0 %v1362
      %1734 = vmatpush.bf16.msra.mxu0 %v1361
      %1735 = vmatpush.bf16.msra.mxu0 %v1360
      %1736 = vmatpush.bf16.msra.mxu0 %v1359
      %1737 = vmatmul.bf16.gmra.mxu0 %v1057
      %v1738 = vpop.f32.mrf.mxu0
      %v1739 = vadd.f32 %v1570, %v1738
      %v1740 = vpop.f32.mrf.mxu0
      %v1741 = vadd.f32 %v1572, %v1740
      %1742 = vmatmul.bf16.gmra.mxu0 %v1060
      %v1743 = vpop.f32.mrf.mxu0
      %v1744 = vadd.f32 %v1575, %v1743
      %v1745 = vpop.f32.mrf.mxu0
      %v1746 = vadd.f32 %v1577, %v1745
      %1747 = vmatmul.bf16.gmra.mxu0 %v1063
      %v1748 = vpop.f32.mrf.mxu0
      %v1749 = vadd.f32 %v1580, %v1748
      %v1750 = vpop.f32.mrf.mxu0
      %v1751 = vadd.f32 %v1582, %v1750
      %1752 = vmatmul.bf16.gmra.mxu0 %v1066
      %v1753 = vpop.f32.mrf.mxu0
      %v1754 = vadd.f32 %v1585, %v1753
      %v1755 = vpop.f32.mrf.mxu0
      %v1756 = vadd.f32 %v1587, %v1755
      %1757 = vmatmul.bf16.gmra.mxu0 %v1069
      %v1758 = vpop.f32.mrf.mxu0
      %v1759 = vadd.f32 %v1590, %v1758
      %v1760 = vpop.f32.mrf.mxu0
      %v1761 = vadd.f32 %v1592, %v1760
      %1762 = vmatmul.bf16.gmra.mxu0 %v1072
      %v1763 = vpop.f32.mrf.mxu0
      %v1764 = vadd.f32 %v1595, %v1763
      %v1765 = vpop.f32.mrf.mxu0
      %v1766 = vadd.f32 %v1597, %v1765
      %1767 = vmatmul.bf16.gmra.mxu0 %v1075
      %v1768 = vpop.f32.mrf.mxu0
      %v1769 = vadd.f32 %v1600, %v1768
      %v1770 = vpop.f32.mrf.mxu0
      %v1771 = vadd.f32 %v1602, %v1770
      %1772 = vmatmul.bf16.gmra.mxu0 %v1078
      %v1773 = vpop.f32.mrf.mxu0
      %v1774 = vadd.f32 %v1605, %v1773
      %v1775 = vpop.f32.mrf.mxu0
      %v1776 = vadd.f32 %v1607, %v1775
      %1777 = vmatmul.bf16.gmra.mxu0 %v1081
      %v1778 = vpop.f32.mrf.mxu0
      %v1779 = vadd.f32 %v1610, %v1778
      %v1780 = vpop.f32.mrf.mxu0
      %v1781 = vadd.f32 %v1612, %v1780
      %1782 = vmatmul.bf16.gmra.mxu0 %v1084
      %v1783 = vpop.f32.mrf.mxu0
      %v1784 = vadd.f32 %v1615, %v1783
      %v1785 = vpop.f32.mrf.mxu0
      %v1786 = vadd.f32 %v1617, %v1785
      %1787 = vmatmul.bf16.gmra.mxu0 %v1087
      %v1788 = vpop.f32.mrf.mxu0
      %v1789 = vadd.f32 %v1620, %v1788
      %v1790 = vpop.f32.mrf.mxu0
      %v1791 = vadd.f32 %v1622, %v1790
      %1792 = vmatmul.bf16.gmra.mxu0 %v1090
      %v1793 = vpop.f32.mrf.mxu0
      %v1794 = vadd.f32 %v1625, %v1793
      %v1795 = vpop.f32.mrf.mxu0
      %v1796 = vadd.f32 %v1627, %v1795
      %1797 = vmatmul.bf16.gmra.mxu0 %v1093
      %v1798 = vpop.f32.mrf.mxu0
      %v1799 = vadd.f32 %v1630, %v1798
      %v1800 = vpop.f32.mrf.mxu0
      %v1801 = vadd.f32 %v1632, %v1800
      %1802 = vmatmul.bf16.gmra.mxu0 %v1096
      %v1803 = vpop.f32.mrf.mxu0
      %v1804 = vadd.f32 %v1635, %v1803
      %v1805 = vpop.f32.mrf.mxu0
      %v1806 = vadd.f32 %v1637, %v1805
      %1807 = vmatmul.bf16.gmra.mxu0 %v1099
      %v1808 = vpop.f32.mrf.mxu0
      %v1809 = vadd.f32 %v1640, %v1808
      %v1810 = vpop.f32.mrf.mxu0
      %v1811 = vadd.f32 %v1642, %v1810
      %1812 = vmatmul.bf16.gmra.mxu0 %v1102
      %v1813 = vpop.f32.mrf.mxu0
      %v1814 = vadd.f32 %v1645, %v1813
      %v1815 = vpop.f32.mrf.mxu0
      %v1816 = vadd.f32 %v1647, %v1815
      %1817 = vmatmul.bf16.gmra.mxu0 %v1105
      %v1818 = vpop.f32.mrf.mxu0
      %v1819 = vadd.f32 %v1650, %v1818
      %v1820 = vpop.f32.mrf.mxu0
      %v1821 = vadd.f32 %v1652, %v1820
      %1822 = vmatmul.bf16.gmra.mxu0 %v1108
      %v1823 = vpop.f32.mrf.mxu0
      %v1824 = vadd.f32 %v1655, %v1823
      %v1825 = vpop.f32.mrf.mxu0
      %v1826 = vadd.f32 %v1657, %v1825
      %1827 = vmatmul.bf16.gmra.mxu0 %v1111
      %v1828 = vpop.f32.mrf.mxu0
      %v1829 = vadd.f32 %v1660, %v1828
      %v1830 = vpop.f32.mrf.mxu0
      %v1831 = vadd.f32 %v1662, %v1830
      %1832 = vmatmul.bf16.gmra.mxu0 %v1114
      %v1833 = vpop.f32.mrf.mxu0
      %v1834 = vadd.f32 %v1665, %v1833
      %v1835 = vpop.f32.mrf.mxu0
      %v1836 = vadd.f32 %v1667, %v1835
      %1837 = vmatmul.bf16.gmra.mxu0 %v1117
      %v1838 = vpop.f32.mrf.mxu0
      %v1839 = vadd.f32 %v1670, %v1838
      %v1840 = vpop.f32.mrf.mxu0
      %v1841 = vadd.f32 %v1672, %v1840
      %1842 = vmatmul.bf16.gmra.mxu0 %v1120
      %v1843 = vpop.f32.mrf.mxu0
      %v1844 = vadd.f32 %v1675, %v1843
      %v1845 = vpop.f32.mrf.mxu0
      %v1846 = vadd.f32 %v1677, %v1845
      %1847 = vmatmul.bf16.gmra.mxu0 %v1123
      %v1848 = vpop.f32.mrf.mxu0
      %v1849 = vadd.f32 %v1680, %v1848
      %v1850 = vpop.f32.mrf.mxu0
      %v1851 = vadd.f32 %v1682, %v1850
      %1852 = vmatmul.bf16.gmra.mxu0 %v1126
      %v1853 = vpop.f32.mrf.mxu0
      %v1854 = vadd.f32 %v1685, %v1853
      %v1855 = vpop.f32.mrf.mxu0
      %v1856 = vadd.f32 %v1687, %v1855
      %1857 = vmatmul.bf16.gmra.mxu0 %v1129
      %v1858 = vpop.f32.mrf.mxu0
      %v1859 = vadd.f32 %v1690, %v1858
      %v1860 = vpop.f32.mrf.mxu0
      %v1861 = vadd.f32 %v1692, %v1860
      %1862 = vmatmul.bf16.gmra.mxu0 %v1132
      %v1863 = vpop.f32.mrf.mxu0
      %v1864 = vadd.f32 %v1695, %v1863
      %v1865 = vpop.f32.mrf.mxu0
      %v1866 = vadd.f32 %v1697, %v1865
      %1867 = vmatmul.bf16.gmra.mxu0 %v1135
      %v1868 = vpop.f32.mrf.mxu0
      %v1869 = vadd.f32 %v1700, %v1868
      %v1870 = vpop.f32.mrf.mxu0
      %v1871 = vadd.f32 %v1702, %v1870
      %1872 = vmatmul.bf16.gmra.mxu0 %v1138
      %v1873 = vpop.f32.mrf.mxu0
      %v1874 = vadd.f32 %v1705, %v1873
      %v1875 = vpop.f32.mrf.mxu0
      %v1876 = vadd.f32 %v1707, %v1875
      %1877 = vmatmul.bf16.gmra.mxu0 %v1141
      %v1878 = vpop.f32.mrf.mxu0
      %v1879 = vadd.f32 %v1710, %v1878
      %v1880 = vpop.f32.mrf.mxu0
      %v1881 = vadd.f32 %v1712, %v1880
      %1882 = vmatmul.bf16.gmra.mxu0 %v1144
      %v1883 = vpop.f32.mrf.mxu0
      %v1884 = vadd.f32 %v1715, %v1883
      %v1885 = vpop.f32.mrf.mxu0
      %v1886 = vadd.f32 %v1717, %v1885
      %1887 = vmatmul.bf16.gmra.mxu0 %v1147
      %v1888 = vpop.f32.mrf.mxu0
      %v1889 = vadd.f32 %v1720, %v1888
      %v1890 = vpop.f32.mrf.mxu0
      %v1891 = vadd.f32 %v1722, %v1890
      %1892 = vmatmul.bf16.gmra.mxu0 %v1150
      %v1893 = vpop.f32.mrf.mxu0
      %v1894 = vadd.f32 %v1725, %v1893
      %v1895 = vpop.f32.mrf.mxu0
      %v1896 = vadd.f32 %v1727, %v1895
      %1897 = vdwg.mxu0
      %v1898 = vadd.f32 %v495, %v1739
      %v1899 = vadd.f32 %v496, %v1741
      %v1900 = vadd.f32 %v497, %v1744
      %v1901 = vadd.f32 %v498, %v1746
      %v1902 = vadd.f32 %v499, %v1749
      %v1903 = vadd.f32 %v500, %v1751
      %v1904 = vadd.f32 %v501, %v1754
      %v1905 = vadd.f32 %v502, %v1756
      %v1906 = vadd.f32 %v503, %v1759
      %v1907 = vadd.f32 %v504, %v1761
      %v1908 = vadd.f32 %v505, %v1764
      %v1909 = vadd.f32 %v506, %v1766
      %v1910 = vadd.f32 %v507, %v1769
      %v1911 = vadd.f32 %v508, %v1771
      %v1912 = vadd.f32 %v509, %v1774
      %v1913 = vadd.f32 %v510, %v1776
      %v1914 = vadd.f32 %v511, %v1779
      %v1915 = vadd.f32 %v512, %v1781
      %v1916 = vadd.f32 %v513, %v1784
      %v1917 = vadd.f32 %v514, %v1786
      %v1918 = vadd.f32 %v515, %v1789
      %v1919 = vadd.f32 %v516, %v1791
      %v1920 = vadd.f32 %v517, %v1794
      %v1921 = vadd.f32 %v518, %v1796
      %v1922 = vadd.f32 %v519, %v1799
      %v1923 = vadd.f32 %v520, %v1801
      %v1924 = vadd.f32 %v521, %v1804
      %v1925 = vadd.f32 %v522, %v1806
      %v1926 = vadd.f32 %v523, %v1809
      %v1927 = vadd.f32 %v524, %v1811
      %v1928 = vadd.f32 %v525, %v1814
      %v1929 = vadd.f32 %v526, %v1816
      %v1930 = vadd.f32 %v527, %v1819
      %v1931 = vadd.f32 %v528, %v1821
      %v1932 = vadd.f32 %v529, %v1824
      %v1933 = vadd.f32 %v530, %v1826
      %v1934 = vadd.f32 %v531, %v1829
      %v1935 = vadd.f32 %v532, %v1831
      %v1936 = vadd.f32 %v533, %v1834
      %v1937 = vadd.f32 %v534, %v1836
      %v1938 = vadd.f32 %v535, %v1839
      %v1939 = vadd.f32 %v536, %v1841
      %v1940 = vadd.f32 %v537, %v1844
      %v1941 = vadd.f32 %v538, %v1846
      %v1942 = vadd.f32 %v539, %v1849
      %v1943 = vadd.f32 %v540, %v1851
      %v1944 = vadd.f32 %v541, %v1854
      %v1945 = vadd.f32 %v542, %v1856
      %v1946 = vadd.f32 %v543, %v1859
      %v1947 = vadd.f32 %v544, %v1861
      %v1948 = vadd.f32 %v545, %v1864
      %v1949 = vadd.f32 %v546, %v1866
      %v1950 = vadd.f32 %v547, %v1869
      %v1951 = vadd.f32 %v548, %v1871
      %v1952 = vadd.f32 %v549, %v1874
      %v1953 = vadd.f32 %v550, %v1876
      %v1954 = vadd.f32 %v551, %v1879
      %v1955 = vadd.f32 %v552, %v1881
      %v1956 = vadd.f32 %v553, %v1884
      %v1957 = vadd.f32 %v554, %v1886
      %v1958 = vadd.f32 %v555, %v1889
      %v1959 = vadd.f32 %v556, %v1891
      %v1960 = vadd.f32 %v557, %v1894
      %v1961 = vadd.f32 %v558, %v1896
      %1962 = vst [vmem:[#allocation2] sm:$0xff] %v1898
      %1963 = vst [vmem:[#allocation2 + $0x8] sm:$0xff] %v1899
      %1964 = vst [vmem:[#allocation2 + $0x10] sm:$0xff] %v1900
      %1965 = vst [vmem:[#allocation2 + $0x18] sm:$0xff] %v1901
      %1966 = vst [vmem:[#allocation2 + $0x20] sm:$0xff] %v1902
      %1967 = vst [vmem:[#allocation2 + $0x28] sm:$0xff] %v1903
      %1968 = vst [vmem:[#allocation2 + $0x30] sm:$0xff] %v1904
      %1969 = vst [vmem:[#allocation2 + $0x38] sm:$0xff] %v1905
      %1970 = vst [vmem:[#allocation2 + $0x40] sm:$0xff] %v1906
      %1971 = vst [vmem:[#allocation2 + $0x48] sm:$0xff] %v1907
      %1972 = vst [vmem:[#allocation2 + $0x50] sm:$0xff] %v1908
      %1973 = vst [vmem:[#allocation2 + $0x58] sm:$0xff] %v1909
      %1974 = vst [vmem:[#allocation2 + $0x60] sm:$0xff] %v1910
      %1975 = vst [vmem:[#allocation2 + $0x68] sm:$0xff] %v1911
      %1976 = vst [vmem:[#allocation2 + $0x70] sm:$0xff] %v1912
      %1977 = vst [vmem:[#allocation2 + $0x78] sm:$0xff] %v1913
      %1978 = vst [vmem:[#allocation2 + $0x80] sm:$0xff] %v1914
      %1979 = vst [vmem:[#allocation2 + $0x88] sm:$0xff] %v1915
      %1980 = vst [vmem:[#allocation2 + $0x90] sm:$0xff] %v1916
      %1981 = vst [vmem:[#allocation2 + $0x98] sm:$0xff] %v1917
      %1982 = vst [vmem:[#allocation2 + $0xa0] sm:$0xff] %v1918
      %1983 = vst [vmem:[#allocation2 + $0xa8] sm:$0xff] %v1919
      %1984 = vst [vmem:[#allocation2 + $0xb0] sm:$0xff] %v1920
      %1985 = vst [vmem:[#allocation2 + $0xb8] sm:$0xff] %v1921
      %1986 = vst [vmem:[#allocation2 + $0xc0] sm:$0xff] %v1922
      %1987 = vst [vmem:[#allocation2 + $0xc8] sm:$0xff] %v1923
      %1988 = vst [vmem:[#allocation2 + $0xd0] sm:$0xff] %v1924
      %1989 = vst [vmem:[#allocation2 + $0xd8] sm:$0xff] %v1925
      %1990 = vst [vmem:[#allocation2 + $0xe0] sm:$0xff] %v1926
      %1991 = vst [vmem:[#allocation2 + $0xe8] sm:$0xff] %v1927
      %1992 = vst [vmem:[#allocation2 + $0xf0] sm:$0xff] %v1928
      %1993 = vst [vmem:[#allocation2 + $0xf8] sm:$0xff] %v1929
      %1994 = vst [vmem:[#allocation2 + $0x100] sm:$0xff] %v1930
      %1995 = vst [vmem:[#allocation2 + $0x108] sm:$0xff] %v1931
      %1996 = vst [vmem:[#allocation2 + $0x110] sm:$0xff] %v1932
      %1997 = vst [vmem:[#allocation2 + $0x118] sm:$0xff] %v1933
      %1998 = vst [vmem:[#allocation2 + $0x120] sm:$0xff] %v1934
      %1999 = vst [vmem:[#allocation2 + $0x128] sm:$0xff] %v1935
      %2000 = vst [vmem:[#allocation2 + $0x130] sm:$0xff] %v1936
      %2001 = vst [vmem:[#allocation2 + $0x138] sm:$0xff] %v1937
      %2002 = vst [vmem:[#allocation2 + $0x140] sm:$0xff] %v1938
      %2003 = vst [vmem:[#allocation2 + $0x148] sm:$0xff] %v1939
      %2004 = vst [vmem:[#allocation2 + $0x150] sm:$0xff] %v1940
      %2005 = vst [vmem:[#allocation2 + $0x158] sm:$0xff] %v1941
      %2006 = vst [vmem:[#allocation2 + $0x160] sm:$0xff] %v1942
      %2007 = vst [vmem:[#allocation2 + $0x168] sm:$0xff] %v1943
      %2008 = vst [vmem:[#allocation2 + $0x170] sm:$0xff] %v1944
      %2009 = vst [vmem:[#allocation2 + $0x178] sm:$0xff] %v1945
      %2010 = vst [vmem:[#allocation2 + $0x180] sm:$0xff] %v1946
      %2011 = vst [vmem:[#allocation2 + $0x188] sm:$0xff] %v1947
      %2012 = vst [vmem:[#allocation2 + $0x190] sm:$0xff] %v1948
      %2013 = vst [vmem:[#allocation2 + $0x198] sm:$0xff] %v1949
      %2014 = vst [vmem:[#allocation2 + $0x1a0] sm:$0xff] %v1950
      %2015 = vst [vmem:[#allocation2 + $0x1a8] sm:$0xff] %v1951
      %2016 = vst [vmem:[#allocation2 + $0x1b0] sm:$0xff] %v1952
      %2017 = vst [vmem:[#allocation2 + $0x1b8] sm:$0xff] %v1953
      %2018 = vst [vmem:[#allocation2 + $0x1c0] sm:$0xff] %v1954
      %2019 = vst [vmem:[#allocation2 + $0x1c8] sm:$0xff] %v1955
      %2020 = vst [vmem:[#allocation2 + $0x1d0] sm:$0xff] %v1956
      %2021 = vst [vmem:[#allocation2 + $0x1d8] sm:$0xff] %v1957
      %2022 = vst [vmem:[#allocation2 + $0x1e0] sm:$0xff] %v1958
      %2023 = vst [vmem:[#allocation2 + $0x1e8] sm:$0xff] %v1959
      %2024 = vst [vmem:[#allocation2 + $0x1f0] sm:$0xff] %v1960
      %2025 = vst [vmem:[#allocation2 + $0x1f8] sm:$0xff] %v1961
      // Predicated region
      $region45: #{_lambda_.1} parent=39 // pred_check
        %p2026 = pneg %p427
      $region46: #{_lambda_.1} parent=39 // pred_check_branch
        %2028 = sbr.rel (%p2026) target = $region48
      $region47: #{_lambda_.1} parent=39 // pred_region
        %v2029 = vld [vmem:[#allocation2] sm:$0xff]
        %v2030 = vld [vmem:[#allocation2 + $0x8] sm:$0xff]
        %v2031 = vld [vmem:[#allocation2 + $0x10] sm:$0xff]
        %v2032 = vld [vmem:[#allocation2 + $0x18] sm:$0xff]
        %v2033 = vld [vmem:[#allocation2 + $0x20] sm:$0xff]
        %v2034 = vld [vmem:[#allocation2 + $0x28] sm:$0xff]
        %v2035 = vld [vmem:[#allocation2 + $0x30] sm:$0xff]
        %v2036 = vld [vmem:[#allocation2 + $0x38] sm:$0xff]
        %v2037 = vld [vmem:[#allocation2 + $0x40] sm:$0xff]
        %v2038 = vld [vmem:[#allocation2 + $0x48] sm:$0xff]
        %v2039 = vld [vmem:[#allocation2 + $0x50] sm:$0xff]
        %v2040 = vld [vmem:[#allocation2 + $0x58] sm:$0xff]
        %v2041 = vld [vmem:[#allocation2 + $0x60] sm:$0xff]
        %v2042 = vld [vmem:[#allocation2 + $0x68] sm:$0xff]
        %v2043 = vld [vmem:[#allocation2 + $0x70] sm:$0xff]
        %v2044 = vld [vmem:[#allocation2 + $0x78] sm:$0xff]
        %v2045 = vld [vmem:[#allocation2 + $0x80] sm:$0xff]
        %v2046 = vld [vmem:[#allocation2 + $0x88] sm:$0xff]
        %v2047 = vld [vmem:[#allocation2 + $0x90] sm:$0xff]
        %v2048 = vld [vmem:[#allocation2 + $0x98] sm:$0xff]
        %v2049 = vld [vmem:[#allocation2 + $0xa0] sm:$0xff]
        %v2050 = vld [vmem:[#allocation2 + $0xa8] sm:$0xff]
        %v2051 = vld [vmem:[#allocation2 + $0xb0] sm:$0xff]
        %v2052 = vld [vmem:[#allocation2 + $0xb8] sm:$0xff]
        %v2053 = vld [vmem:[#allocation2 + $0xc0] sm:$0xff]
        %v2054 = vld [vmem:[#allocation2 + $0xc8] sm:$0xff]
        %v2055 = vld [vmem:[#allocation2 + $0xd0] sm:$0xff]
        %v2056 = vld [vmem:[#allocation2 + $0xd8] sm:$0xff]
        %v2057 = vld [vmem:[#allocation2 + $0xe0] sm:$0xff]
        %v2058 = vld [vmem:[#allocation2 + $0xe8] sm:$0xff]
        %v2059 = vld [vmem:[#allocation2 + $0xf0] sm:$0xff]
        %v2060 = vld [vmem:[#allocation2 + $0xf8] sm:$0xff]
        %v2061 = vld [vmem:[#allocation2 + $0x100] sm:$0xff]
        %v2062 = vld [vmem:[#allocation2 + $0x108] sm:$0xff]
        %v2063 = vld [vmem:[#allocation2 + $0x110] sm:$0xff]
        %v2064 = vld [vmem:[#allocation2 + $0x118] sm:$0xff]
        %v2065 = vld [vmem:[#allocation2 + $0x120] sm:$0xff]
        %v2066 = vld [vmem:[#allocation2 + $0x128] sm:$0xff]
        %v2067 = vld [vmem:[#allocation2 + $0x130] sm:$0xff]
        %v2068 = vld [vmem:[#allocation2 + $0x138] sm:$0xff]
        %v2069 = vld [vmem:[#allocation2 + $0x140] sm:$0xff]
        %v2070 = vld [vmem:[#allocation2 + $0x148] sm:$0xff]
        %v2071 = vld [vmem:[#allocation2 + $0x150] sm:$0xff]
        %v2072 = vld [vmem:[#allocation2 + $0x158] sm:$0xff]
        %v2073 = vld [vmem:[#allocation2 + $0x160] sm:$0xff]
        %v2074 = vld [vmem:[#allocation2 + $0x168] sm:$0xff]
        %v2075 = vld [vmem:[#allocation2 + $0x170] sm:$0xff]
        %v2076 = vld [vmem:[#allocation2 + $0x178] sm:$0xff]
        %v2077 = vld [vmem:[#allocation2 + $0x180] sm:$0xff]
        %v2078 = vld [vmem:[#allocation2 + $0x188] sm:$0xff]
        %v2079 = vld [vmem:[#allocation2 + $0x190] sm:$0xff]
        %v2080 = vld [vmem:[#allocation2 + $0x198] sm:$0xff]
        %v2081 = vld [vmem:[#allocation2 + $0x1a0] sm:$0xff]
        %v2082 = vld [vmem:[#allocation2 + $0x1a8] sm:$0xff]
        %v2083 = vld [vmem:[#allocation2 + $0x1b0] sm:$0xff]
        %v2084 = vld [vmem:[#allocation2 + $0x1b8] sm:$0xff]
        %v2085 = vld [vmem:[#allocation2 + $0x1c0] sm:$0xff]
        %v2086 = vld [vmem:[#allocation2 + $0x1c8] sm:$0xff]
        %v2087 = vld [vmem:[#allocation2 + $0x1d0] sm:$0xff]
        %v2088 = vld [vmem:[#allocation2 + $0x1d8] sm:$0xff]
        %v2089 = vld [vmem:[#allocation2 + $0x1e0] sm:$0xff]
        %v2090 = vld [vmem:[#allocation2 + $0x1e8] sm:$0xff]
        %v2091 = vld [vmem:[#allocation2 + $0x1f0] sm:$0xff]
        %v2092 = vld [vmem:[#allocation2 + $0x1f8] sm:$0xff]
        %v2093 = vld [vmem:[%s401] sm:$0x1]
        %v2095 = vperm.slane %v2093, 0
        %v2097 = vmul.f32 %v2029, %v2095
        %v2098 = vmul.f32 %v2030, %v2095
        %v2099 = vmul.f32 %v2031, %v2095
        %v2100 = vmul.f32 %v2032, %v2095
        %v2101 = vmul.f32 %v2033, %v2095
        %v2102 = vmul.f32 %v2034, %v2095
        %v2103 = vmul.f32 %v2035, %v2095
        %v2104 = vmul.f32 %v2036, %v2095
        %v2105 = vmul.f32 %v2037, %v2095
        %v2106 = vmul.f32 %v2038, %v2095
        %v2107 = vmul.f32 %v2039, %v2095
        %v2108 = vmul.f32 %v2040, %v2095
        %v2109 = vmul.f32 %v2041, %v2095
        %v2110 = vmul.f32 %v2042, %v2095
        %v2111 = vmul.f32 %v2043, %v2095
        %v2112 = vmul.f32 %v2044, %v2095
        %v2113 = vmul.f32 %v2045, %v2095
        %v2114 = vmul.f32 %v2046, %v2095
        %v2115 = vmul.f32 %v2047, %v2095
        %v2116 = vmul.f32 %v2048, %v2095
        %v2117 = vmul.f32 %v2049, %v2095
        %v2118 = vmul.f32 %v2050, %v2095
        %v2119 = vmul.f32 %v2051, %v2095
        %v2120 = vmul.f32 %v2052, %v2095
        %v2121 = vmul.f32 %v2053, %v2095
        %v2122 = vmul.f32 %v2054, %v2095
        %v2123 = vmul.f32 %v2055, %v2095
        %v2124 = vmul.f32 %v2056, %v2095
        %v2125 = vmul.f32 %v2057, %v2095
        %v2126 = vmul.f32 %v2058, %v2095
        %v2127 = vmul.f32 %v2059, %v2095
        %v2128 = vmul.f32 %v2060, %v2095
        %v2129 = vmul.f32 %v2061, %v2095
        %v2130 = vmul.f32 %v2062, %v2095
        %v2131 = vmul.f32 %v2063, %v2095
        %v2132 = vmul.f32 %v2064, %v2095
        %v2133 = vmul.f32 %v2065, %v2095
        %v2134 = vmul.f32 %v2066, %v2095
        %v2135 = vmul.f32 %v2067, %v2095
        %v2136 = vmul.f32 %v2068, %v2095
        %v2137 = vmul.f32 %v2069, %v2095
        %v2138 = vmul.f32 %v2070, %v2095
        %v2139 = vmul.f32 %v2071, %v2095
        %v2140 = vmul.f32 %v2072, %v2095
        %v2141 = vmul.f32 %v2073, %v2095
        %v2142 = vmul.f32 %v2074, %v2095
        %v2143 = vmul.f32 %v2075, %v2095
        %v2144 = vmul.f32 %v2076, %v2095
        %v2145 = vmul.f32 %v2077, %v2095
        %v2146 = vmul.f32 %v2078, %v2095
        %v2147 = vmul.f32 %v2079, %v2095
        %v2148 = vmul.f32 %v2080, %v2095
        %v2149 = vmul.f32 %v2081, %v2095
        %v2150 = vmul.f32 %v2082, %v2095
        %v2151 = vmul.f32 %v2083, %v2095
        %v2152 = vmul.f32 %v2084, %v2095
        %v2153 = vmul.f32 %v2085, %v2095
        %v2154 = vmul.f32 %v2086, %v2095
        %v2155 = vmul.f32 %v2087, %v2095
        %v2156 = vmul.f32 %v2088, %v2095
        %v2157 = vmul.f32 %v2089, %v2095
        %v2158 = vmul.f32 %v2090, %v2095
        %v2159 = vmul.f32 %v2091, %v2095
        %v2160 = vmul.f32 %v2092, %v2095
        %v2161 = vld [vmem:[%s407] sm:$0x1]
        %v2163 = vperm.slane %v2161, 0
        %v2165 = vadd.f32 %v2097, %v2163
        %v2166 = vadd.f32 %v2098, %v2163
        %v2167 = vadd.f32 %v2099, %v2163
        %v2168 = vadd.f32 %v2100, %v2163
        %v2169 = vadd.f32 %v2101, %v2163
        %v2170 = vadd.f32 %v2102, %v2163
        %v2171 = vadd.f32 %v2103, %v2163
        %v2172 = vadd.f32 %v2104, %v2163
        %v2173 = vadd.f32 %v2105, %v2163
        %v2174 = vadd.f32 %v2106, %v2163
        %v2175 = vadd.f32 %v2107, %v2163
        %v2176 = vadd.f32 %v2108, %v2163
        %v2177 = vadd.f32 %v2109, %v2163
        %v2178 = vadd.f32 %v2110, %v2163
        %v2179 = vadd.f32 %v2111, %v2163
        %v2180 = vadd.f32 %v2112, %v2163
        %v2181 = vadd.f32 %v2113, %v2163
        %v2182 = vadd.f32 %v2114, %v2163
        %v2183 = vadd.f32 %v2115, %v2163
        %v2184 = vadd.f32 %v2116, %v2163
        %v2185 = vadd.f32 %v2117, %v2163
        %v2186 = vadd.f32 %v2118, %v2163
        %v2187 = vadd.f32 %v2119, %v2163
        %v2188 = vadd.f32 %v2120, %v2163
        %v2189 = vadd.f32 %v2121, %v2163
        %v2190 = vadd.f32 %v2122, %v2163
        %v2191 = vadd.f32 %v2123, %v2163
        %v2192 = vadd.f32 %v2124, %v2163
        %v2193 = vadd.f32 %v2125, %v2163
        %v2194 = vadd.f32 %v2126, %v2163
        %v2195 = vadd.f32 %v2127, %v2163
        %v2196 = vadd.f32 %v2128, %v2163
        %v2197 = vadd.f32 %v2129, %v2163
        %v2198 = vadd.f32 %v2130, %v2163
        %v2199 = vadd.f32 %v2131, %v2163
        %v2200 = vadd.f32 %v2132, %v2163
        %v2201 = vadd.f32 %v2133, %v2163
        %v2202 = vadd.f32 %v2134, %v2163
        %v2203 = vadd.f32 %v2135, %v2163
        %v2204 = vadd.f32 %v2136, %v2163
        %v2205 = vadd.f32 %v2137, %v2163
        %v2206 = vadd.f32 %v2138, %v2163
        %v2207 = vadd.f32 %v2139, %v2163
        %v2208 = vadd.f32 %v2140, %v2163
        %v2209 = vadd.f32 %v2141, %v2163
        %v2210 = vadd.f32 %v2142, %v2163
        %v2211 = vadd.f32 %v2143, %v2163
        %v2212 = vadd.f32 %v2144, %v2163
        %v2213 = vadd.f32 %v2145, %v2163
        %v2214 = vadd.f32 %v2146, %v2163
        %v2215 = vadd.f32 %v2147, %v2163
        %v2216 = vadd.f32 %v2148, %v2163
        %v2217 = vadd.f32 %v2149, %v2163
        %v2218 = vadd.f32 %v2150, %v2163
        %v2219 = vadd.f32 %v2151, %v2163
        %v2220 = vadd.f32 %v2152, %v2163
        %v2221 = vadd.f32 %v2153, %v2163
        %v2222 = vadd.f32 %v2154, %v2163
        %v2223 = vadd.f32 %v2155, %v2163
        %v2224 = vadd.f32 %v2156, %v2163
        %v2225 = vadd.f32 %v2157, %v2163
        %v2226 = vadd.f32 %v2158, %v2163
        %v2227 = vadd.f32 %v2159, %v2163
        %v2228 = vadd.f32 %v2160, %v2163
        %vm2229 = vcmp.ge.f32.partialorder %v2165, 0.0
        %vm2230 = vcmp.ge.f32.partialorder %v2166, 0.0
        %vm2231 = vcmp.ge.f32.partialorder %v2167, 0.0
        %vm2232 = vcmp.ge.f32.partialorder %v2168, 0.0
        %vm2233 = vcmp.ge.f32.partialorder %v2169, 0.0
        %vm2234 = vcmp.ge.f32.partialorder %v2170, 0.0
        %vm2235 = vcmp.ge.f32.partialorder %v2171, 0.0
        %vm2236 = vcmp.ge.f32.partialorder %v2172, 0.0
        %vm2237 = vcmp.ge.f32.partialorder %v2173, 0.0
        %vm2238 = vcmp.ge.f32.partialorder %v2174, 0.0
        %vm2239 = vcmp.ge.f32.partialorder %v2175, 0.0
        %vm2240 = vcmp.ge.f32.partialorder %v2176, 0.0
        %vm2241 = vcmp.ge.f32.partialorder %v2177, 0.0
        %vm2242 = vcmp.ge.f32.partialorder %v2178, 0.0
        %vm2243 = vcmp.ge.f32.partialorder %v2179, 0.0
        %vm2244 = vcmp.ge.f32.partialorder %v2180, 0.0
        %vm2245 = vcmp.ge.f32.partialorder %v2181, 0.0
        %vm2246 = vcmp.ge.f32.partialorder %v2182, 0.0
        %vm2247 = vcmp.ge.f32.partialorder %v2183, 0.0
        %vm2248 = vcmp.ge.f32.partialorder %v2184, 0.0
        %vm2249 = vcmp.ge.f32.partialorder %v2185, 0.0
        %vm2250 = vcmp.ge.f32.partialorder %v2186, 0.0
        %vm2251 = vcmp.ge.f32.partialorder %v2187, 0.0
        %vm2252 = vcmp.ge.f32.partialorder %v2188, 0.0
        %vm2253 = vcmp.ge.f32.partialorder %v2189, 0.0
        %vm2254 = vcmp.ge.f32.partialorder %v2190, 0.0
        %vm2255 = vcmp.ge.f32.partialorder %v2191, 0.0
        %vm2256 = vcmp.ge.f32.partialorder %v2192, 0.0
        %vm2257 = vcmp.ge.f32.partialorder %v2193, 0.0
        %vm2258 = vcmp.ge.f32.partialorder %v2194, 0.0
        %vm2259 = vcmp.ge.f32.partialorder %v2195, 0.0
        %vm2260 = vcmp.ge.f32.partialorder %v2196, 0.0
        %vm2261 = vcmp.ge.f32.partialorder %v2197, 0.0
        %vm2262 = vcmp.ge.f32.partialorder %v2198, 0.0
        %vm2263 = vcmp.ge.f32.partialorder %v2199, 0.0
        %vm2264 = vcmp.ge.f32.partialorder %v2200, 0.0
        %vm2265 = vcmp.ge.f32.partialorder %v2201, 0.0
        %vm2266 = vcmp.ge.f32.partialorder %v2202, 0.0
        %vm2267 = vcmp.ge.f32.partialorder %v2203, 0.0
        %vm2268 = vcmp.ge.f32.partialorder %v2204, 0.0
        %vm2269 = vcmp.ge.f32.partialorder %v2205, 0.0
        %vm2270 = vcmp.ge.f32.partialorder %v2206, 0.0
        %vm2271 = vcmp.ge.f32.partialorder %v2207, 0.0
        %vm2272 = vcmp.ge.f32.partialorder %v2208, 0.0
        %vm2273 = vcmp.ge.f32.partialorder %v2209, 0.0
        %vm2274 = vcmp.ge.f32.partialorder %v2210, 0.0
        %vm2275 = vcmp.ge.f32.partialorder %v2211, 0.0
        %vm2276 = vcmp.ge.f32.partialorder %v2212, 0.0
        %vm2277 = vcmp.ge.f32.partialorder %v2213, 0.0
        %vm2278 = vcmp.ge.f32.partialorder %v2214, 0.0
        %vm2279 = vcmp.ge.f32.partialorder %v2215, 0.0
        %vm2280 = vcmp.ge.f32.partialorder %v2216, 0.0
        %vm2281 = vcmp.ge.f32.partialorder %v2217, 0.0
        %vm2282 = vcmp.ge.f32.partialorder %v2218, 0.0
        %vm2283 = vcmp.ge.f32.partialorder %v2219, 0.0
        %vm2284 = vcmp.ge.f32.partialorder %v2220, 0.0
        %vm2285 = vcmp.ge.f32.partialorder %v2221, 0.0
        %vm2286 = vcmp.ge.f32.partialorder %v2222, 0.0
        %vm2287 = vcmp.ge.f32.partialorder %v2223, 0.0
        %vm2288 = vcmp.ge.f32.partialorder %v2224, 0.0
        %vm2289 = vcmp.ge.f32.partialorder %v2225, 0.0
        %vm2290 = vcmp.ge.f32.partialorder %v2226, 0.0
        %vm2291 = vcmp.ge.f32.partialorder %v2227, 0.0
        %vm2292 = vcmp.ge.f32.partialorder %v2228, 0.0
        %v2293 = vld [vmem:[%s413] sm:$0x1]
        %v2295 = vperm.slane %v2293, 0
        %v2297 = vmul.f32 %v2295, %v2165
        %v2298 = vmul.f32 %v2295, %v2166
        %v2299 = vmul.f32 %v2295, %v2167
        %v2300 = vmul.f32 %v2295, %v2168
        %v2301 = vmul.f32 %v2295, %v2169
        %v2302 = vmul.f32 %v2295, %v2170
        %v2303 = vmul.f32 %v2295, %v2171
        %v2304 = vmul.f32 %v2295, %v2172
        %v2305 = vmul.f32 %v2295, %v2173
        %v2306 = vmul.f32 %v2295, %v2174
        %v2307 = vmul.f32 %v2295, %v2175
        %v2308 = vmul.f32 %v2295, %v2176
        %v2309 = vmul.f32 %v2295, %v2177
        %v2310 = vmul.f32 %v2295, %v2178
        %v2311 = vmul.f32 %v2295, %v2179
        %v2312 = vmul.f32 %v2295, %v2180
        %v2313 = vmul.f32 %v2295, %v2181
        %v2314 = vmul.f32 %v2295, %v2182
        %v2315 = vmul.f32 %v2295, %v2183
        %v2316 = vmul.f32 %v2295, %v2184
        %v2317 = vmul.f32 %v2295, %v2185
        %v2318 = vmul.f32 %v2295, %v2186
        %v2319 = vmul.f32 %v2295, %v2187
        %v2320 = vmul.f32 %v2295, %v2188
        %v2321 = vmul.f32 %v2295, %v2189
        %v2322 = vmul.f32 %v2295, %v2190
        %v2323 = vmul.f32 %v2295, %v2191
        %v2324 = vmul.f32 %v2295, %v2192
        %v2325 = vmul.f32 %v2295, %v2193
        %v2326 = vmul.f32 %v2295, %v2194
        %v2327 = vmul.f32 %v2295, %v2195
        %v2328 = vmul.f32 %v2295, %v2196
        %v2329 = vmul.f32 %v2295, %v2197
        %v2330 = vmul.f32 %v2295, %v2198
        %v2331 = vmul.f32 %v2295, %v2199
        %v2332 = vmul.f32 %v2295, %v2200
        %v2333 = vmul.f32 %v2295, %v2201
        %v2334 = vmul.f32 %v2295, %v2202
        %v2335 = vmul.f32 %v2295, %v2203
        %v2336 = vmul.f32 %v2295, %v2204
        %v2337 = vmul.f32 %v2295, %v2205
        %v2338 = vmul.f32 %v2295, %v2206
        %v2339 = vmul.f32 %v2295, %v2207
        %v2340 = vmul.f32 %v2295, %v2208
        %v2341 = vmul.f32 %v2295, %v2209
        %v2342 = vmul.f32 %v2295, %v2210
        %v2343 = vmul.f32 %v2295, %v2211
        %v2344 = vmul.f32 %v2295, %v2212
        %v2345 = vmul.f32 %v2295, %v2213
        %v2346 = vmul.f32 %v2295, %v2214
        %v2347 = vmul.f32 %v2295, %v2215
        %v2348 = vmul.f32 %v2295, %v2216
        %v2349 = vmul.f32 %v2295, %v2217
        %v2350 = vmul.f32 %v2295, %v2218
        %v2351 = vmul.f32 %v2295, %v2219
        %v2352 = vmul.f32 %v2295, %v2220
        %v2353 = vmul.f32 %v2295, %v2221
        %v2354 = vmul.f32 %v2295, %v2222
        %v2355 = vmul.f32 %v2295, %v2223
        %v2356 = vmul.f32 %v2295, %v2224
        %v2357 = vmul.f32 %v2295, %v2225
        %v2358 = vmul.f32 %v2295, %v2226
        %v2359 = vmul.f32 %v2295, %v2227
        %v2360 = vmul.f32 %v2295, %v2228
        %v2361 = vsel %vm2229, %v2165, %v2297
        %v2362 = vsel %vm2230, %v2166, %v2298
        %v2363 = vsel %vm2231, %v2167, %v2299
        %v2364 = vsel %vm2232, %v2168, %v2300
        %v2365 = vsel %vm2233, %v2169, %v2301
        %v2366 = vsel %vm2234, %v2170, %v2302
        %v2367 = vsel %vm2235, %v2171, %v2303
        %v2368 = vsel %vm2236, %v2172, %v2304
        %v2369 = vsel %vm2237, %v2173, %v2305
        %v2370 = vsel %vm2238, %v2174, %v2306
        %v2371 = vsel %vm2239, %v2175, %v2307
        %v2372 = vsel %vm2240, %v2176, %v2308
        %v2373 = vsel %vm2241, %v2177, %v2309
        %v2374 = vsel %vm2242, %v2178, %v2310
        %v2375 = vsel %vm2243, %v2179, %v2311
        %v2376 = vsel %vm2244, %v2180, %v2312
        %v2377 = vsel %vm2245, %v2181, %v2313
        %v2378 = vsel %vm2246, %v2182, %v2314
        %v2379 = vsel %vm2247, %v2183, %v2315
        %v2380 = vsel %vm2248, %v2184, %v2316
        %v2381 = vsel %vm2249, %v2185, %v2317
        %v2382 = vsel %vm2250, %v2186, %v2318
        %v2383 = vsel %vm2251, %v2187, %v2319
        %v2384 = vsel %vm2252, %v2188, %v2320
        %v2385 = vsel %vm2253, %v2189, %v2321
        %v2386 = vsel %vm2254, %v2190, %v2322
        %v2387 = vsel %vm2255, %v2191, %v2323
        %v2388 = vsel %vm2256, %v2192, %v2324
        %v2389 = vsel %vm2257, %v2193, %v2325
        %v2390 = vsel %vm2258, %v2194, %v2326
        %v2391 = vsel %vm2259, %v2195, %v2327
        %v2392 = vsel %vm2260, %v2196, %v2328
        %v2393 = vsel %vm2261, %v2197, %v2329
        %v2394 = vsel %vm2262, %v2198, %v2330
        %v2395 = vsel %vm2263, %v2199, %v2331
        %v2396 = vsel %vm2264, %v2200, %v2332
        %v2397 = vsel %vm2265, %v2201, %v2333
        %v2398 = vsel %vm2266, %v2202, %v2334
        %v2399 = vsel %vm2267, %v2203, %v2335
        %v2400 = vsel %vm2268, %v2204, %v2336
        %v2401 = vsel %vm2269, %v2205, %v2337
        %v2402 = vsel %vm2270, %v2206, %v2338
        %v2403 = vsel %vm2271, %v2207, %v2339
        %v2404 = vsel %vm2272, %v2208, %v2340
        %v2405 = vsel %vm2273, %v2209, %v2341
        %v2406 = vsel %vm2274, %v2210, %v2342
        %v2407 = vsel %vm2275, %v2211, %v2343
        %v2408 = vsel %vm2276, %v2212, %v2344
        %v2409 = vsel %vm2277, %v2213, %v2345
        %v2410 = vsel %vm2278, %v2214, %v2346
        %v2411 = vsel %vm2279, %v2215, %v2347
        %v2412 = vsel %vm2280, %v2216, %v2348
        %v2413 = vsel %vm2281, %v2217, %v2349
        %v2414 = vsel %vm2282, %v2218, %v2350
        %v2415 = vsel %vm2283, %v2219, %v2351
        %v2416 = vsel %vm2284, %v2220, %v2352
        %v2417 = vsel %vm2285, %v2221, %v2353
        %v2418 = vsel %vm2286, %v2222, %v2354
        %v2419 = vsel %vm2287, %v2223, %v2355
        %v2420 = vsel %vm2288, %v2224, %v2356
        %v2421 = vsel %vm2289, %v2225, %v2357
        %v2422 = vsel %vm2290, %v2226, %v2358
        %v2423 = vsel %vm2291, %v2227, %v2359
        %v2424 = vsel %vm2292, %v2228, %v2360
        %2425 = vst [vmem:[%s425] sm:$0xff] %v2361
        %2426 = vst [vmem:[%s425 + $0x8] sm:$0xff] %v2362
        %2427 = vst [vmem:[%s425 + $0x10] sm:$0xff] %v2363
        %2428 = vst [vmem:[%s425 + $0x18] sm:$0xff] %v2364
        %2429 = vst [vmem:[%s425 + $0x20] sm:$0xff] %v2365
        %2430 = vst [vmem:[%s425 + $0x28] sm:$0xff] %v2366
        %2431 = vst [vmem:[%s425 + $0x30] sm:$0xff] %v2367
        %2432 = vst [vmem:[%s425 + $0x38] sm:$0xff] %v2368
        %2433 = vst [vmem:[%s425 + $0x40] sm:$0xff] %v2369
        %2434 = vst [vmem:[%s425 + $0x48] sm:$0xff] %v2370
        %2435 = vst [vmem:[%s425 + $0x50] sm:$0xff] %v2371
        %2436 = vst [vmem:[%s425 + $0x58] sm:$0xff] %v2372
        %2437 = vst [vmem:[%s425 + $0x60] sm:$0xff] %v2373
        %2438 = vst [vmem:[%s425 + $0x68] sm:$0xff] %v2374
        %2439 = vst [vmem:[%s425 + $0x70] sm:$0xff] %v2375
        %2440 = vst [vmem:[%s425 + $0x78] sm:$0xff] %v2376
        %2441 = vst [vmem:[%s425 + $0x80] sm:$0xff] %v2377
        %2442 = vst [vmem:[%s425 + $0x88] sm:$0xff] %v2378
        %2443 = vst [vmem:[%s425 + $0x90] sm:$0xff] %v2379
        %2444 = vst [vmem:[%s425 + $0x98] sm:$0xff] %v2380
        %2445 = vst [vmem:[%s425 + $0xa0] sm:$0xff] %v2381
        %2446 = vst [vmem:[%s425 + $0xa8] sm:$0xff] %v2382
        %2447 = vst [vmem:[%s425 + $0xb0] sm:$0xff] %v2383
        %2448 = vst [vmem:[%s425 + $0xb8] sm:$0xff] %v2384
        %2449 = vst [vmem:[%s425 + $0xc0] sm:$0xff] %v2385
        %2450 = vst [vmem:[%s425 + $0xc8] sm:$0xff] %v2386
        %2451 = vst [vmem:[%s425 + $0xd0] sm:$0xff] %v2387
        %2452 = vst [vmem:[%s425 + $0xd8] sm:$0xff] %v2388
        %2453 = vst [vmem:[%s425 + $0xe0] sm:$0xff] %v2389
        %2454 = vst [vmem:[%s425 + $0xe8] sm:$0xff] %v2390
        %2455 = vst [vmem:[%s425 + $0xf0] sm:$0xff] %v2391
        %2456 = vst [vmem:[%s425 + $0xf8] sm:$0xff] %v2392
        %2457 = vst [vmem:[%s425 + $0x100] sm:$0xff] %v2393
        %2458 = vst [vmem:[%s425 + $0x108] sm:$0xff] %v2394
        %2459 = vst [vmem:[%s425 + $0x110] sm:$0xff] %v2395
        %2460 = vst [vmem:[%s425 + $0x118] sm:$0xff] %v2396
        %2461 = vst [vmem:[%s425 + $0x120] sm:$0xff] %v2397
        %2462 = vst [vmem:[%s425 + $0x128] sm:$0xff] %v2398
        %2463 = vst [vmem:[%s425 + $0x130] sm:$0xff] %v2399
        %2464 = vst [vmem:[%s425 + $0x138] sm:$0xff] %v2400
        %2465 = vst [vmem:[%s425 + $0x140] sm:$0xff] %v2401
        %2466 = vst [vmem:[%s425 + $0x148] sm:$0xff] %v2402
        %2467 = vst [vmem:[%s425 + $0x150] sm:$0xff] %v2403
        %2468 = vst [vmem:[%s425 + $0x158] sm:$0xff] %v2404
        %2469 = vst [vmem:[%s425 + $0x160] sm:$0xff] %v2405
        %2470 = vst [vmem:[%s425 + $0x168] sm:$0xff] %v2406
        %2471 = vst [vmem:[%s425 + $0x170] sm:$0xff] %v2407
        %2472 = vst [vmem:[%s425 + $0x178] sm:$0xff] %v2408
        %2473 = vst [vmem:[%s425 + $0x180] sm:$0xff] %v2409
        %2474 = vst [vmem:[%s425 + $0x188] sm:$0xff] %v2410
        %2475 = vst [vmem:[%s425 + $0x190] sm:$0xff] %v2411
        %2476 = vst [vmem:[%s425 + $0x198] sm:$0xff] %v2412
        %2477 = vst [vmem:[%s425 + $0x1a0] sm:$0xff] %v2413
        %2478 = vst [vmem:[%s425 + $0x1a8] sm:$0xff] %v2414
        %2479 = vst [vmem:[%s425 + $0x1b0] sm:$0xff] %v2415
        %2480 = vst [vmem:[%s425 + $0x1b8] sm:$0xff] %v2416
        %2481 = vst [vmem:[%s425 + $0x1c0] sm:$0xff] %v2417
        %2482 = vst [vmem:[%s425 + $0x1c8] sm:$0xff] %v2418
        %2483 = vst [vmem:[%s425 + $0x1d0] sm:$0xff] %v2419
        %2484 = vst [vmem:[%s425 + $0x1d8] sm:$0xff] %v2420
        %2485 = vst [vmem:[%s425 + $0x1e0] sm:$0xff] %v2421
        %2486 = vst [vmem:[%s425 + $0x1e8] sm:$0xff] %v2422
        %2487 = vst [vmem:[%s425 + $0x1f0] sm:$0xff] %v2423
        %2488 = vst [vmem:[%s425 + $0x1f8] sm:$0xff] %v2424
      $region48: #{_lambda_.1} parent=39 // pred_fallthru
        _
      %s2489 = smul.u32 64, %s23
      %p2490 = scmp.lt.s32.totalorder %s22, 0
      %s2491 = scalar_select %p2490, %s22, 0
      %p2492 = scmp.lt.s32.totalorder %s2489, 255
      %s2493 = scalar_select %p2492, %s2489, 255
      %p2494 = scmp.lt.s32.totalorder %s24, 0
      %s2495 = scalar_select %p2494, %s24, 0
      %s2496 = sadd.s32 %s2495, %s2493
      %s2497 = smul.addr %s2491, 256
      %s2498 = sadd.s32 %s2496, %s2497
      %s2499 = smul.addr %s2498, 8
      %s2500 = scalar_lea.vmem %s5, %s2499
      // Predicated region
      $region49: #{_lambda_.1} parent=39 // pred_check
        %p2501 = pneg %p208
      $region50: #{_lambda_.1} parent=39 // pred_check_branch
        %2503 = sbr.rel (%p2501) target = $region52
      $region51: #{_lambda_.1} parent=39 // pred_region
        %s2504 = smul.u32 64, %s23
      $region52: #{_lambda_.1} parent=39 // pred_fallthru
        _
    $region40: #{_lambda_.1} parent=5 // pred_fallthru
      _
    %p2505 = scmp.le.s32.totalorder 2, %s11
    // Predicated region
    $region53: #{_lambda_.1} parent=5 // pred_check
      %p2506 = pneg %p2505
    $region54: #{_lambda_.1} parent=5 // pred_check_branch
      %2508 = sbr.rel (%p2506) target = $region56
    $region55: #{_lambda_.1} parent=5 // pred_region
      %s2509 = ssub.s32 %s11, 2
      // Predicated region
      $region57: #{_lambda_.1} parent=55 // pred_check
        %p2510 = pneg %p214
      $region58: #{_lambda_.1} parent=55 // pred_check_branch
        %2512 = sbr.rel (%p2510) target = $region60
      $region59: #{_lambda_.1} parent=55 // pred_region
        %s2513 = smul.u32 64, %s27
        %p2514 = scmp.lt.s32.totalorder %s26, 0
        %s2515 = scalar_select %p2514, %s26, 0
        %p2516 = scmp.lt.s32.totalorder %s2513, 255
        %s2517 = scalar_select %p2516, %s2513, 255
        %p2518 = scmp.lt.s32.totalorder %s28, 0
        %s2519 = scalar_select %p2518, %s28, 0
        %s2520 = sadd.s32 %s2519, %s2517
        %s2521 = smul.addr %s2515, 256
        %s2522 = sadd.s32 %s2520, %s2521
        %s2523 = smul.addr %s2522, 8
        %s2524 = scalar_lea.vmem %s5, %s2523
      $region60: #{_lambda_.1} parent=55 // pred_fallthru
        _
    $region56: #{_lambda_.1} parent=5 // pred_fallthru
      _
  $region6: #{_lambda_.1} parent=0 // loop_footer
    %s15 = sadd.s32 1, %s11
  $region7: #{_lambda_.1} parent=0 // loop_footer_branch
    %10 = sbr.rel target = $region3
  $region8: #{_lambda_.1} parent=0 // loop_exit
    _

</llo_original>
